<compile_context>
chip_gen: v6e
topology: v6e:2x2x1
jax: 0.10.0
libtpu: 0.0.40
codegen_flags: <defaults>
</compile_context>

<pallas_src>
import math

import jax
import jax.numpy as jnp
import numpy as np
from jax.experimental import pallas as pl
from jax.experimental.pallas import tpu as pltpu


def vad_lstm_fc_kernel(x_ref, len_ref, wih_ref, whh_ref, b_ref, wfc_ref, bfc_ref,
                       out_ref, xw_ref):
    """LSTM recurrence with fused fc head over time-major, packed-gate data.

    x_ref   : (T*Bp, D)   f32  time-major inputs, flattened over (t, batch)
    len_ref : (Bp, 1)     i32  sequence lengths (0 for padded batch rows)
    wih_ref : (D, Gp)     f32  W_ih^T, gates i|f|g|o packed to Hq lanes each
    whh_ref : (Gp, Gp)    f32  W_hh^T, rows >= H zero, gate columns packed
    b_ref   : (1, Gp)     f32  b_ih + b_hh, gate-packed
    wfc_ref : (1, Gp)     f32  fc weight, zero beyond lane H
    bfc_ref : (1, 1)      f32  fc bias
    out_ref : (Bp, Tp)    f32  logits slab, (batch, time), lane-dense
    xw_ref  : (T*Bp, Gp)  f32  VMEM scratch: hoisted input projection + bias
    """
    TB, _ = x_ref.shape
    Bp = len_ref.shape[0]
    T = TB // Bp
    Gp = whh_ref.shape[1]          # packed gate-group width (multiple of 128)
    Hq = Gp // 4                   # per-gate lane width inside the group
    Tp = out_ref.shape[1]

    # Hoisted input projection + bias fold: one big MXU matmul with no time
    # dependence, off the serial per-timestep chain.
    xw_ref[...] = (jnp.dot(x_ref[...], wih_ref[...],
                           preferred_element_type=jnp.float32)
                   + b_ref[...])

    # Small loop-invariant values (~1 vreg each).  whh_ref is deliberately NOT
    # hoisted: it is re-read from VMEM inside every step so its tile never
    # lives across the unrolled loop (review fix #1).
    lens = len_ref[...]                                         # (Bp, 1) i32
    wfc_b = jnp.broadcast_to(wfc_ref[...], (Bp, Gp))            # (Bp, Gp)
    bfc_b = jnp.broadcast_to(bfc_ref[...], (Bp, 1))             # (Bp, 1)
    lane = jax.lax.broadcasted_iota(jnp.int32, (Bp, Gp), 1)
    g_sel = (lane >= 2 * Hq) & (lane < 3 * Hq)                  # tanh lanes (g gate)
    col = jax.lax.broadcasted_iota(jnp.int32, (Bp, Tp), 1)      # output time column

    def step(t, carry):
        h, c, acc = carry                                       # (Bp,Gp),(Bp,Gp),(Bp,Tp)
        row = pl.multiple_of(t * Bp, 8)
        # Only the hidden->gates matmul remains on the recurrent critical path.
        gates = xw_ref[pl.ds(row, Bp), :] + jnp.dot(
            h, whh_ref[...], preferred_element_type=jnp.float32)    # (Bp, Gp)

        # One sigmoid + one tanh on the packed vreg, per-lane select, then
        # realign f/g/o onto the i-gate lanes with XLU rotations.
        act = jnp.where(g_sel, jnp.tanh(gates), jax.nn.sigmoid(gates))
        i_al = act                                          # i gate at lanes [0, Hq)
        f_al = pltpu.roll(act, shift=3 * Hq, axis=1)        # f gate -> lanes [0, Hq)
        g_al = pltpu.roll(act, shift=2 * Hq, axis=1)        # g gate -> lanes [0, Hq)
        o_al = pltpu.roll(act, shift=1 * Hq, axis=1)        # o gate -> lanes [0, Hq)
        c_new = f_al * c + i_al * g_al
        h_new = o_al * jnp.tanh(c_new)
        # Lanes >= H of h_new/c_new are don't-care: zero whh rows and zero wfc
        # lanes guarantee they never influence gates or logits.

        # Fused fc head + length mask (off the carried h/c dependency chain):
        # padded positions (t >= length) produce exactly the fc bias, matching
        # pad_packed_sequence(padding_value=0) -> Linear.
        logit = jnp.sum(h_new * wfc_b, axis=-1, keepdims=True)      # (Bp, 1)
        keep = (t < lens).astype(jnp.float32)                       # (Bp, 1)
        val = logit * keep + bfc_b                                  # (Bp, 1)
        acc = jnp.where(col == t, jnp.broadcast_to(val, (Bp, Tp)), acc)
        return h_new, c_new, acc

    h0 = jnp.zeros((Bp, Gp), jnp.float32)
    c0 = jnp.zeros((Bp, Gp), jnp.float32)
    acc0 = jnp.zeros((Bp, Tp), jnp.float32)
    # Fully unroll the (small, static) time loop for cross-step overlap.
    _, _, acc = jax.lax.fori_loop(0, T, step, (h0, c0, acc0), unroll=True)

    # Single unmasked, lane-dense store of the whole logits slab.
    out_ref[...] = acc


def _round_up(x, m):
    return (x + m - 1) // m * m


@jax.jit
def vad_forward(x_btd, lengths, wih_t, whh_t, b, wfc, bfc):
    """Equivalent of VADCNNAE.forward(inputs, input_lengths) with fresh state."""
    B, T, D = x_btd.shape
    H = whh_t.shape[0]
    Bp = _round_up(B, 8)          # sublane-dense batch
    Hq = _round_up(H, 32)         # per-gate lane width in the packed group
    Gp = 4 * Hq                   # packed gate group width (multiple of 128)
    Tp = _round_up(T, 128)        # lane-dense output (time) width

    x_btd = x_btd.astype(jnp.float32)
    lengths_i = lengths.astype(jnp.int32)

    # Zero out padded timesteps so garbage/NaN padding cannot reach the
    # recurrence (pack_padded_sequence genuinely excludes those steps).
    time_mask = jnp.arange(T, dtype=jnp.int32)[None, :] < lengths_i[:, None]
    x_btd = jnp.where(time_mask[:, :, None], x_btd, 0.0)

    def pack_gate_cols(w):
        # (..., 4H) -> (..., Gp): each gate block zero-padded to Hq lanes,
        # then packed contiguously (i|f|g|o) into one lane group.
        parts = jnp.split(w, 4, axis=-1)
        pad = [(0, 0)] * (w.ndim - 1) + [(0, Hq - H)]
        return jnp.concatenate([jnp.pad(p, pad) for p in parts], axis=-1)

    wih_p = pack_gate_cols(wih_t.astype(jnp.float32))                    # (D, Gp)
    whh_p = jnp.pad(pack_gate_cols(whh_t.astype(jnp.float32)),
                    ((0, Gp - H), (0, 0)))                               # (Gp, Gp)
    b_p = pack_gate_cols(b.astype(jnp.float32))                          # (1, Gp)
    wfc_p = jnp.pad(wfc.astype(jnp.float32), ((0, 0), (0, Gp - H)))      # (1, Gp)
    bfc_p = bfc.astype(jnp.float32)                                      # (1, 1)

    # Time-major, batch padded to Bp, flattened over (t, batch).
    x_tbd = jnp.transpose(x_btd, (1, 0, 2))                              # (T, B, D)
    x_tbd = jnp.pad(x_tbd, ((0, 0), (0, Bp - B), (0, 0)))                # (T, Bp, D)
    x_flat = x_tbd.reshape(T * Bp, D)
    lens = jnp.pad(lengths_i, (0, Bp - B)).reshape(Bp, 1)                # (Bp, 1)

    out = pl.pallas_call(
        vad_lstm_fc_kernel,
        out_shape=jax.ShapeDtypeStruct((Bp, Tp), jnp.float32),
        grid_spec=pltpu.PrefetchScalarGridSpec(
            num_scalar_prefetch=0,
            grid=(1,),
            in_specs=[
                pl.BlockSpec((T * Bp, D), lambda i: (0, 0)),   # x (flattened)
                pl.BlockSpec((Bp, 1), lambda i: (0, 0)),       # lengths
                pl.BlockSpec((D, Gp), lambda i: (0, 0)),       # W_ih^T (gate-packed)
                pl.BlockSpec((Gp, Gp), lambda i: (0, 0)),      # W_hh^T (gate-packed)
                pl.BlockSpec((1, Gp), lambda i: (0, 0)),       # bias
                pl.BlockSpec((1, Gp), lambda i: (0, 0)),       # fc weight
                pl.BlockSpec((1, 1), lambda i: (0, 0)),        # fc bias
            ],
            out_specs=pl.BlockSpec((Bp, Tp), lambda i: (0, 0)),
            scratch_shapes=[pltpu.VMEM((T * Bp, Gp), jnp.float32)],
        ),
        compiler_params=pltpu.CompilerParams(
            dimension_semantics=("arbitrary",),
            vmem_limit_bytes=32 * 1024 * 1024),
    )(x_flat, lens, wih_p, whh_p, b_p, wfc_p, bfc_p)

    # Drop padded batch rows / padded time columns; already (batch, time).
    return out[:B, :T]


def reference_forward(x_btd, lengths, wih_t, whh_t, b, wfc, bfc):
    """Pure-JAX reference with identical semantics (for correctness check)."""
    B, T, D = x_btd.shape
    H = whh_t.shape[0]

    def step(carry, x_t):
        h, c = carry
        gates = x_t @ wih_t + h @ whh_t + b[0]
        i_g = jax.nn.sigmoid(gates[:, :H])
        f_g = jax.nn.sigmoid(gates[:, H:2 * H])
        g_g = jnp.tanh(gates[:, 2 * H:3 * H])
        o_g = jax.nn.sigmoid(gates[:, 3 * H:])
        c = f_g * c + i_g * g_g
        h = o_g * jnp.tanh(c)
        return (h, c), h

    x_tbd = jnp.transpose(x_btd, (1, 0, 2))
    (_, _), hs = jax.lax.scan(step, (jnp.zeros((B, H)), jnp.zeros((B, H))), x_tbd)
    hs = jnp.transpose(hs, (1, 0, 2))                 # (B, T, H)
    mask = (jnp.arange(T)[None, :] < lengths[:, None]).astype(jnp.float32)
    hs = hs * mask[:, :, None]                        # padded outputs -> 0
    logits = hs @ wfc[0] + bfc[0, 0]                  # (B, T)
    return logits


if __name__ == "__main__":
    # Small shapes consistent with the module: batch=2, seq=8, input_dim=16, hidden=32.
    B, T, D, H = 2, 8, 16, 32

    key = jax.random.PRNGKey(0)
    kx, k1, k2, k3, k4, k5, k6 = jax.random.split(key, 7)

    x = jax.random.normal(kx, (B, T, D), dtype=jnp.float32)
    lengths = jnp.array([T, 5], dtype=jnp.int32)      # max(input_lengths) == T

    # Deterministic parameter init (PyTorch LSTM-style uniform(-1/sqrt(H), 1/sqrt(H))).
    s = 1.0 / math.sqrt(H)
    wih_t = jax.random.uniform(k1, (D, 4 * H), jnp.float32, -s, s)   # W_ih^T, gates i,f,g,o
    whh_t = jax.random.uniform(k2, (H, 4 * H), jnp.float32, -s, s)   # W_hh^T
    b = (jax.random.uniform(k3, (1, 4 * H), jnp.float32, -s, s)
         + jax.random.uniform(k4, (1, 4 * H), jnp.float32, -s, s))   # b_ih + b_hh
    wfc = jax.random.uniform(k5, (1, H), jnp.float32, -s, s)         # fc weight
    bfc = jax.random.uniform(k6, (1, 1), jnp.float32, -s, s)         # fc bias

    logits = vad_forward(x, lengths, wih_t, whh_t, b, wfc, bfc)
    logits = jax.block_until_ready(logits)

    ref = reference_forward(x, lengths, wih_t, whh_t, b, wfc, bfc)
    np.testing.assert_allclose(np.asarray(logits), np.asarray(ref),
                               rtol=1e-5, atol=1e-5)
    assert logits.shape == (B, T)

    print("KERNEL_OK")
</pallas_src>

<mosaic_0001>
module attributes {stable_mosaic.version = 11 : i64} {
  func.func @vad_lstm_fc_kernel(%arg0: i32, %arg1: memref<64x16xf32, #tpu.memory_space<vmem>>, %arg2: memref<8x1xi32, #tpu.memory_space<vmem>>, %arg3: memref<16x128xf32, #tpu.memory_space<vmem>>, %arg4: memref<128x128xf32, #tpu.memory_space<vmem>>, %arg5: memref<1x128xf32, #tpu.memory_space<vmem>>, %arg6: memref<1x128xf32, #tpu.memory_space<vmem>>, %arg7: memref<1x1xf32, #tpu.memory_space<vmem>>, %arg8: memref<8x128xf32, #tpu.memory_space<vmem>>, %arg9: memref<64x128xf32, #tpu.memory_space<vmem>>) attributes {dimension_semantics = [#tpu.dimension_semantics<arbitrary>], iteration_bounds = array<i64: 1>, scalar_prefetch = 0 : i64, scratch_operands = 1 : i64, tpu.core_type = #tpu.core_type<tc>, window_params = [{pipeline_mode = #tpu.pipeline_mode<synchronous>, transform_indices = @transform_0, window_bounds = array<i64: 64, 16>}, {pipeline_mode = #tpu.pipeline_mode<synchronous>, transform_indices = @transform_1, window_bounds = array<i64: 8, 1>}, {pipeline_mode = #tpu.pipeline_mode<synchronous>, transform_indices = @transform_2, window_bounds = array<i64: 16, 128>}, {pipeline_mode = #tpu.pipeline_mode<synchronous>, transform_indices = @transform_3, window_bounds = array<i64: 128, 128>}, {pipeline_mode = #tpu.pipeline_mode<synchronous>, transform_indices = @transform_4, window_bounds = array<i64: 1, 128>}, {pipeline_mode = #tpu.pipeline_mode<synchronous>, transform_indices = @transform_5, window_bounds = array<i64: 1, 128>}, {pipeline_mode = #tpu.pipeline_mode<synchronous>, transform_indices = @transform_6, window_bounds = array<i64: 1, 1>}, {pipeline_mode = #tpu.pipeline_mode<synchronous>, transform_indices = @transform_7, window_bounds = array<i64: 8, 128>}]} {
    %c0 = arith.constant 0 : index
    %c0_0 = arith.constant 0 : index
    %0 = vector.load %arg1[%c0, %c0_0] : memref<64x16xf32, #tpu.memory_space<vmem>>, vector<64x16xf32>
    %c0_1 = arith.constant 0 : index
    %c0_2 = arith.constant 0 : index
    %1 = vector.load %arg3[%c0_1, %c0_2] : memref<16x128xf32, #tpu.memory_space<vmem>>, vector<16x128xf32>
    %cst = arith.constant dense<0.000000e+00> : vector<64x128xf32>
    %2 = tpu.matmul %0, %1, %cst {dimension_numbers = #tpu.dot_dimension_numbers<[1], [0], [0], [1], [0, 0, 1, 1], [], []>} : vector<64x16xf32>, vector<16x128xf32>, vector<64x128xf32> -> vector<64x128xf32>
    %c0_3 = arith.constant 0 : index
    %c0_4 = arith.constant 0 : index
    %3 = vector.load %arg5[%c0_3, %c0_4] : memref<1x128xf32, #tpu.memory_space<vmem>>, vector<1x128xf32>
    %4 = vector.broadcast %3 : vector<1x128xf32> to vector<64x128xf32>
    %5 = arith.addf %2, %4 : vector<64x128xf32>
    %c0_5 = arith.constant 0 : index
    %c0_6 = arith.constant 0 : index
    %6 = vector.load %arg9[%c0_5, %c0_6] : memref<64x128xf32, #tpu.memory_space<vmem>>, vector<64x128xf32>
    tpu.vector_store %arg9[%c0_5, %c0_6], %5 {strides = array<i32>} : memref<64x128xf32, #tpu.memory_space<vmem>>, vector<64x128xf32>,
    %c0_7 = arith.constant 0 : index
    %c0_8 = arith.constant 0 : index
    %7 = vector.load %arg2[%c0_7, %c0_8] : memref<8x1xi32, #tpu.memory_space<vmem>>, vector<8x1xi32>
    %c0_9 = arith.constant 0 : index
    %c0_10 = arith.constant 0 : index
    %8 = vector.load %arg6[%c0_9, %c0_10] : memref<1x128xf32, #tpu.memory_space<vmem>>, vector<1x128xf32>
    %9 = vector.shape_cast %8 : vector<1x128xf32> to vector<1x128xf32>
    %10 = vector.broadcast %9 : vector<1x128xf32> to vector<8x128xf32>
    %c0_11 = arith.constant 0 : index
    %c0_12 = arith.constant 0 : index
    %11 = vector.load %arg7[%c0_11, %c0_12] : memref<1x1xf32, #tpu.memory_space<vmem>>, vector<1x1xf32>
    %12 = vector.shape_cast %11 : vector<1x1xf32> to vector<1x1xf32>
    %13 = vector.broadcast %12 : vector<1x1xf32> to vector<8x1xf32>
    %14 = tpu.iota {dimensions = array<i32: 1>} : vector<8x128xi32>
    %c64_i32 = arith.constant 64 : i32
    %15 = vector.broadcast %c64_i32 : i32 to vector<8x128xi32>
    %16 = arith.cmpi sge, %14, %15 : vector<8x128xi32>
    %c96_i32 = arith.constant 96 : i32
    %17 = vector.broadcast %c96_i32 : i32 to vector<8x128xi32>
    %18 = arith.cmpi slt, %14, %17 : vector<8x128xi32>
    %19 = arith.andi %16, %18 : vector<8x128xi1>
    %20 = tpu.iota {dimensions = array<i32: 1>} : vector<8x128xi32>
    %cst_13 = arith.constant 0.000000e+00 : f32
    %21 = vector.broadcast %cst_13 : f32 to vector<8x128xf32>
    %cst_14 = arith.constant 0.000000e+00 : f32
    %22 = vector.broadcast %cst_14 : f32 to vector<8x128xf32>
    %cst_15 = arith.constant 0.000000e+00 : f32
    %23 = vector.broadcast %cst_15 : f32 to vector<8x128xf32>
    %c0_i32 = arith.constant 0 : i32
    %c8_i32 = arith.constant 8 : i32
    %24 = arith.muli %c0_i32, %c8_i32 : i32
    %25 = tpu.assume_multiple %24, 8 : i32
    %26 = arith.index_cast %25 : i32 to index
    %c0_16 = arith.constant 0 : index
    %27 = vector.load %arg9[%26, %c0_16] : memref<64x128xf32, #tpu.memory_space<vmem>>, vector<8x128xf32>
    %c0_17 = arith.constant 0 : index
    %c0_18 = arith.constant 0 : index
    %28 = vector.load %arg4[%c0_17, %c0_18] : memref<128x128xf32, #tpu.memory_space<vmem>>, vector<128x128xf32>
    %cst_19 = arith.constant dense<0.000000e+00> : vector<8x128xf32>
    %29 = tpu.matmul %21, %28, %cst_19 {dimension_numbers = #tpu.dot_dimension_numbers<[1], [0], [0], [1], [0, 0, 1, 1], [], []>} : vector<8x128xf32>, vector<128x128xf32>, vector<8x128xf32> -> vector<8x128xf32>
    %30 = arith.addf %27, %29 : vector<8x128xf32>
    %31 = math.tanh %30 : vector<8x128xf32>
    %32 = arith.negf %30 : vector<8x128xf32>
    %33 = math.exp %32 : vector<8x128xf32>
    %cst_20 = arith.constant 1.000000e+00 : f32
    %34 = vector.broadcast %cst_20 : f32 to vector<8x128xf32>
    %35 = arith.addf %34, %33 : vector<8x128xf32>
    %36 = arith.divf %34, %35 : vector<8x128xf32>
    %37 = arith.select %19, %31, %36 : vector<8x128xi1>, vector<8x128xf32>
    %c96_i32_21 = arith.constant 96 : i32
    %38 = tpu.dynamic_rotate %37 by %c96_i32_21 dim 1 : vector<8x128xf32>, i32 -> vector<8x128xf32>
    %c64_i32_22 = arith.constant 64 : i32
    %39 = tpu.dynamic_rotate %37 by %c64_i32_22 dim 1 : vector<8x128xf32>, i32 -> vector<8x128xf32>
    %c32_i32 = arith.constant 32 : i32
    %40 = tpu.dynamic_rotate %37 by %c32_i32 dim 1 : vector<8x128xf32>, i32 -> vector<8x128xf32>
    %41 = arith.mulf %38, %22 : vector<8x128xf32>
    %42 = arith.mulf %37, %39 : vector<8x128xf32>
    %43 = arith.addf %41, %42 : vector<8x128xf32>
    %44 = math.tanh %43 : vector<8x128xf32>
    %45 = arith.mulf %40, %44 : vector<8x128xf32>
    %46 = arith.mulf %45, %10 : vector<8x128xf32>
    %cst_23 = arith.constant dense<0.000000e+00> : vector<8xf32>
    %47 = vector.multi_reduction <add>, %46, %cst_23 [1] : vector<8x128xf32> to vector<8xf32>
    %48 = vector.shape_cast %47 : vector<8xf32> to vector<8x1xf32>
    %49 = vector.broadcast %c0_i32 : i32 to vector<8x1xi32>
    %50 = arith.cmpi slt, %49, %7 : vector<8x1xi32>
    %51 = arith.extui %50 : vector<8x1xi1> to vector<8x1xi32>
    %52 = arith.sitofp %51 : vector<8x1xi32> to vector<8x1xf32>
    %53 = arith.mulf %48, %52 : vector<8x1xf32>
    %54 = arith.addf %53, %13 : vector<8x1xf32>
    %55 = vector.broadcast %c0_i32 : i32 to vector<8x128xi32>
    %56 = arith.cmpi eq, %20, %55 : vector<8x128xi32>
    %57 = vector.shape_cast %54 : vector<8x1xf32> to vector<8x1xf32>
    %58 = vector.broadcast %57 : vector<8x1xf32> to vector<8x128xf32>
    %59 = arith.select %56, %58, %23 : vector<8x128xi1>, vector<8x128xf32>
    %c1_i32 = arith.constant 1 : i32
    %c8_i32_24 = arith.constant 8 : i32
    %60 = arith.muli %c1_i32, %c8_i32_24 : i32
    %61 = tpu.assume_multiple %60, 8 : i32
    %62 = arith.index_cast %61 : i32 to index
    %c0_25 = arith.constant 0 : index
    %63 = vector.load %arg9[%62, %c0_25] : memref<64x128xf32, #tpu.memory_space<vmem>>, vector<8x128xf32>
    %c0_26 = arith.constant 0 : index
    %c0_27 = arith.constant 0 : index
    %64 = vector.load %arg4[%c0_26, %c0_27] : memref<128x128xf32, #tpu.memory_space<vmem>>, vector<128x128xf32>
    %cst_28 = arith.constant dense<0.000000e+00> : vector<8x128xf32>
    %65 = tpu.matmul %45, %64, %cst_28 {dimension_numbers = #tpu.dot_dimension_numbers<[1], [0], [0], [1], [0, 0, 1, 1], [], []>} : vector<8x128xf32>, vector<128x128xf32>, vector<8x128xf32> -> vector<8x128xf32>
    %66 = arith.addf %63, %65 : vector<8x128xf32>
    %67 = math.tanh %66 : vector<8x128xf32>
    %68 = arith.negf %66 : vector<8x128xf32>
    %69 = math.exp %68 : vector<8x128xf32>
    %cst_29 = arith.constant 1.000000e+00 : f32
    %70 = vector.broadcast %cst_29 : f32 to vector<8x128xf32>
    %71 = arith.addf %70, %69 : vector<8x128xf32>
    %72 = arith.divf %70, %71 : vector<8x128xf32>
    %73 = arith.select %19, %67, %72 : vector<8x128xi1>, vector<8x128xf32>
    %c96_i32_30 = arith.constant 96 : i32
    %74 = tpu.dynamic_rotate %73 by %c96_i32_30 dim 1 : vector<8x128xf32>, i32 -> vector<8x128xf32>
    %c64_i32_31 = arith.constant 64 : i32
    %75 = tpu.dynamic_rotate %73 by %c64_i32_31 dim 1 : vector<8x128xf32>, i32 -> vector<8x128xf32>
    %c32_i32_32 = arith.constant 32 : i32
    %76 = tpu.dynamic_rotate %73 by %c32_i32_32 dim 1 : vector<8x128xf32>, i32 -> vector<8x128xf32>
    %77 = arith.mulf %74, %43 : vector<8x128xf32>
    %78 = arith.mulf %73, %75 : vector<8x128xf32>
    %79 = arith.addf %77, %78 : vector<8x128xf32>
    %80 = math.tanh %79 : vector<8x128xf32>
    %81 = arith.mulf %76, %80 : vector<8x128xf32>
    %82 = arith.mulf %81, %10 : vector<8x128xf32>
    %cst_33 = arith.constant dense<0.000000e+00> : vector<8xf32>
    %83 = vector.multi_reduction <add>, %82, %cst_33 [1] : vector<8x128xf32> to vector<8xf32>
    %84 = vector.shape_cast %83 : vector<8xf32> to vector<8x1xf32>
    %85 = vector.broadcast %c1_i32 : i32 to vector<8x1xi32>
    %86 = arith.cmpi slt, %85, %7 : vector<8x1xi32>
    %87 = arith.extui %86 : vector<8x1xi1> to vector<8x1xi32>
    %88 = arith.sitofp %87 : vector<8x1xi32> to vector<8x1xf32>
    %89 = arith.mulf %84, %88 : vector<8x1xf32>
    %90 = arith.addf %89, %13 : vector<8x1xf32>
    %91 = vector.broadcast %c1_i32 : i32 to vector<8x128xi32>
    %92 = arith.cmpi eq, %20, %91 : vector<8x128xi32>
    %93 = vector.shape_cast %90 : vector<8x1xf32> to vector<8x1xf32>
    %94 = vector.broadcast %93 : vector<8x1xf32> to vector<8x128xf32>
    %95 = arith.select %92, %94, %59 : vector<8x128xi1>, vector<8x128xf32>
    %c2_i32 = arith.constant 2 : i32
    %c8_i32_34 = arith.constant 8 : i32
    %96 = arith.muli %c2_i32, %c8_i32_34 : i32
    %97 = tpu.assume_multiple %96, 8 : i32
    %98 = arith.index_cast %97 : i32 to index
    %c0_35 = arith.constant 0 : index
    %99 = vector.load %arg9[%98, %c0_35] : memref<64x128xf32, #tpu.memory_space<vmem>>, vector<8x128xf32>
    %c0_36 = arith.constant 0 : index
    %c0_37 = arith.constant 0 : index
    %100 = vector.load %arg4[%c0_36, %c0_37] : memref<128x128xf32, #tpu.memory_space<vmem>>, vector<128x128xf32>
    %cst_38 = arith.constant dense<0.000000e+00> : vector<8x128xf32>
    %101 = tpu.matmul %81, %100, %cst_38 {dimension_numbers = #tpu.dot_dimension_numbers<[1], [0], [0], [1], [0, 0, 1, 1], [], []>} : vector<8x128xf32>, vector<128x128xf32>, vector<8x128xf32> -> vector<8x128xf32>
    %102 = arith.addf %99, %101 : vector<8x128xf32>
    %103 = math.tanh %102 : vector<8x128xf32>
    %104 = arith.negf %102 : vector<8x128xf32>
    %105 = math.exp %104 : vector<8x128xf32>
    %cst_39 = arith.constant 1.000000e+00 : f32
    %106 = vector.broadcast %cst_39 : f32 to vector<8x128xf32>
    %107 = arith.addf %106, %105 : vector<8x128xf32>
    %108 = arith.divf %106, %107 : vector<8x128xf32>
    %109 = arith.select %19, %103, %108 : vector<8x128xi1>, vector<8x128xf32>
    %c96_i32_40 = arith.constant 96 : i32
    %110 = tpu.dynamic_rotate %109 by %c96_i32_40 dim 1 : vector<8x128xf32>, i32 -> vector<8x128xf32>
    %c64_i32_41 = arith.constant 64 : i32
    %111 = tpu.dynamic_rotate %109 by %c64_i32_41 dim 1 : vector<8x128xf32>, i32 -> vector<8x128xf32>
    %c32_i32_42 = arith.constant 32 : i32
    %112 = tpu.dynamic_rotate %109 by %c32_i32_42 dim 1 : vector<8x128xf32>, i32 -> vector<8x128xf32>
    %113 = arith.mulf %110, %79 : vector<8x128xf32>
    %114 = arith.mulf %109, %111 : vector<8x128xf32>
    %115 = arith.addf %113, %114 : vector<8x128xf32>
    %116 = math.tanh %115 : vector<8x128xf32>
    %117 = arith.mulf %112, %116 : vector<8x128xf32>
    %118 = arith.mulf %117, %10 : vector<8x128xf32>
    %cst_43 = arith.constant dense<0.000000e+00> : vector<8xf32>
    %119 = vector.multi_reduction <add>, %118, %cst_43 [1] : vector<8x128xf32> to vector<8xf32>
    %120 = vector.shape_cast %119 : vector<8xf32> to vector<8x1xf32>
    %121 = vector.broadcast %c2_i32 : i32 to vector<8x1xi32>
    %122 = arith.cmpi slt, %121, %7 : vector<8x1xi32>
    %123 = arith.extui %122 : vector<8x1xi1> to vector<8x1xi32>
    %124 = arith.sitofp %123 : vector<8x1xi32> to vector<8x1xf32>
    %125 = arith.mulf %120, %124 : vector<8x1xf32>
    %126 = arith.addf %125, %13 : vector<8x1xf32>
    %127 = vector.broadcast %c2_i32 : i32 to vector<8x128xi32>
    %128 = arith.cmpi eq, %20, %127 : vector<8x128xi32>
    %129 = vector.shape_cast %126 : vector<8x1xf32> to vector<8x1xf32>
    %130 = vector.broadcast %129 : vector<8x1xf32> to vector<8x128xf32>
    %131 = arith.select %128, %130, %95 : vector<8x128xi1>, vector<8x128xf32>
    %c3_i32 = arith.constant 3 : i32
    %c8_i32_44 = arith.constant 8 : i32
    %132 = arith.muli %c3_i32, %c8_i32_44 : i32
    %133 = tpu.assume_multiple %132, 8 : i32
    %134 = arith.index_cast %133 : i32 to index
    %c0_45 = arith.constant 0 : index
    %135 = vector.load %arg9[%134, %c0_45] : memref<64x128xf32, #tpu.memory_space<vmem>>, vector<8x128xf32>
    %c0_46 = arith.constant 0 : index
    %c0_47 = arith.constant 0 : index
    %136 = vector.load %arg4[%c0_46, %c0_47] : memref<128x128xf32, #tpu.memory_space<vmem>>, vector<128x128xf32>
    %cst_48 = arith.constant dense<0.000000e+00> : vector<8x128xf32>
    %137 = tpu.matmul %117, %136, %cst_48 {dimension_numbers = #tpu.dot_dimension_numbers<[1], [0], [0], [1], [0, 0, 1, 1], [], []>} : vector<8x128xf32>, vector<128x128xf32>, vector<8x128xf32> -> vector<8x128xf32>
    %138 = arith.addf %135, %137 : vector<8x128xf32>
    %139 = math.tanh %138 : vector<8x128xf32>
    %140 = arith.negf %138 : vector<8x128xf32>
    %141 = math.exp %140 : vector<8x128xf32>
    %cst_49 = arith.constant 1.000000e+00 : f32
    %142 = vector.broadcast %cst_49 : f32 to vector<8x128xf32>
    %143 = arith.addf %142, %141 : vector<8x128xf32>
    %144 = arith.divf %142, %143 : vector<8x128xf32>
    %145 = arith.select %19, %139, %144 : vector<8x128xi1>, vector<8x128xf32>
    %c96_i32_50 = arith.constant 96 : i32
    %146 = tpu.dynamic_rotate %145 by %c96_i32_50 dim 1 : vector<8x128xf32>, i32 -> vector<8x128xf32>
    %c64_i32_51 = arith.constant 64 : i32
    %147 = tpu.dynamic_rotate %145 by %c64_i32_51 dim 1 : vector<8x128xf32>, i32 -> vector<8x128xf32>
    %c32_i32_52 = arith.constant 32 : i32
    %148 = tpu.dynamic_rotate %145 by %c32_i32_52 dim 1 : vector<8x128xf32>, i32 -> vector<8x128xf32>
    %149 = arith.mulf %146, %115 : vector<8x128xf32>
    %150 = arith.mulf %145, %147 : vector<8x128xf32>
    %151 = arith.addf %149, %150 : vector<8x128xf32>
    %152 = math.tanh %151 : vector<8x128xf32>
    %153 = arith.mulf %148, %152 : vector<8x128xf32>
    %154 = arith.mulf %153, %10 : vector<8x128xf32>
    %cst_53 = arith.constant dense<0.000000e+00> : vector<8xf32>
    %155 = vector.multi_reduction <add>, %154, %cst_53 [1] : vector<8x128xf32> to vector<8xf32>
    %156 = vector.shape_cast %155 : vector<8xf32> to vector<8x1xf32>
    %157 = vector.broadcast %c3_i32 : i32 to vector<8x1xi32>
    %158 = arith.cmpi slt, %157, %7 : vector<8x1xi32>
    %159 = arith.extui %158 : vector<8x1xi1> to vector<8x1xi32>
    %160 = arith.sitofp %159 : vector<8x1xi32> to vector<8x1xf32>
    %161 = arith.mulf %156, %160 : vector<8x1xf32>
    %162 = arith.addf %161, %13 : vector<8x1xf32>
    %163 = vector.broadcast %c3_i32 : i32 to vector<8x128xi32>
    %164 = arith.cmpi eq, %20, %163 : vector<8x128xi32>
    %165 = vector.shape_cast %162 : vector<8x1xf32> to vector<8x1xf32>
    %166 = vector.broadcast %165 : vector<8x1xf32> to vector<8x128xf32>
    %167 = arith.select %164, %166, %131 : vector<8x128xi1>, vector<8x128xf32>
    %c4_i32 = arith.constant 4 : i32
    %c8_i32_54 = arith.constant 8 : i32
    %168 = arith.muli %c4_i32, %c8_i32_54 : i32
    %169 = tpu.assume_multiple %168, 8 : i32
    %170 = arith.index_cast %169 : i32 to index
    %c0_55 = arith.constant 0 : index
    %171 = vector.load %arg9[%170, %c0_55] : memref<64x128xf32, #tpu.memory_space<vmem>>, vector<8x128xf32>
    %c0_56 = arith.constant 0 : index
    %c0_57 = arith.constant 0 : index
    %172 = vector.load %arg4[%c0_56, %c0_57] : memref<128x128xf32, #tpu.memory_space<vmem>>, vector<128x128xf32>
    %cst_58 = arith.constant dense<0.000000e+00> : vector<8x128xf32>
    %173 = tpu.matmul %153, %172, %cst_58 {dimension_numbers = #tpu.dot_dimension_numbers<[1], [0], [0], [1], [0, 0, 1, 1], [], []>} : vector<8x128xf32>, vector<128x128xf32>, vector<8x128xf32> -> vector<8x128xf32>
    %174 = arith.addf %171, %173 : vector<8x128xf32>
    %175 = math.tanh %174 : vector<8x128xf32>
    %176 = arith.negf %174 : vector<8x128xf32>
    %177 = math.exp %176 : vector<8x128xf32>
    %cst_59 = arith.constant 1.000000e+00 : f32
    %178 = vector.broadcast %cst_59 : f32 to vector<8x128xf32>
    %179 = arith.addf %178, %177 : vector<8x128xf32>
    %180 = arith.divf %178, %179 : vector<8x128xf32>
    %181 = arith.select %19, %175, %180 : vector<8x128xi1>, vector<8x128xf32>
    %c96_i32_60 = arith.constant 96 : i32
    %182 = tpu.dynamic_rotate %181 by %c96_i32_60 dim 1 : vector<8x128xf32>, i32 -> vector<8x128xf32>
    %c64_i32_61 = arith.constant 64 : i32
    %183 = tpu.dynamic_rotate %181 by %c64_i32_61 dim 1 : vector<8x128xf32>, i32 -> vector<8x128xf32>
    %c32_i32_62 = arith.constant 32 : i32
    %184 = tpu.dynamic_rotate %181 by %c32_i32_62 dim 1 : vector<8x128xf32>, i32 -> vector<8x128xf32>
    %185 = arith.mulf %182, %151 : vector<8x128xf32>
    %186 = arith.mulf %181, %183 : vector<8x128xf32>
    %187 = arith.addf %185, %186 : vector<8x128xf32>
    %188 = math.tanh %187 : vector<8x128xf32>
    %189 = arith.mulf %184, %188 : vector<8x128xf32>
    %190 = arith.mulf %189, %10 : vector<8x128xf32>
    %cst_63 = arith.constant dense<0.000000e+00> : vector<8xf32>
    %191 = vector.multi_reduction <add>, %190, %cst_63 [1] : vector<8x128xf32> to vector<8xf32>
    %192 = vector.shape_cast %191 : vector<8xf32> to vector<8x1xf32>
    %193 = vector.broadcast %c4_i32 : i32 to vector<8x1xi32>
    %194 = arith.cmpi slt, %193, %7 : vector<8x1xi32>
    %195 = arith.extui %194 : vector<8x1xi1> to vector<8x1xi32>
    %196 = arith.sitofp %195 : vector<8x1xi32> to vector<8x1xf32>
    %197 = arith.mulf %192, %196 : vector<8x1xf32>
    %198 = arith.addf %197, %13 : vector<8x1xf32>
    %199 = vector.broadcast %c4_i32 : i32 to vector<8x128xi32>
    %200 = arith.cmpi eq, %20, %199 : vector<8x128xi32>
    %201 = vector.shape_cast %198 : vector<8x1xf32> to vector<8x1xf32>
    %202 = vector.broadcast %201 : vector<8x1xf32> to vector<8x128xf32>
    %203 = arith.select %200, %202, %167 : vector<8x128xi1>, vector<8x128xf32>
    %c5_i32 = arith.constant 5 : i32
    %c8_i32_64 = arith.constant 8 : i32
    %204 = arith.muli %c5_i32, %c8_i32_64 : i32
    %205 = tpu.assume_multiple %204, 8 : i32
    %206 = arith.index_cast %205 : i32 to index
    %c0_65 = arith.constant 0 : index
    %207 = vector.load %arg9[%206, %c0_65] : memref<64x128xf32, #tpu.memory_space<vmem>>, vector<8x128xf32>
    %c0_66 = arith.constant 0 : index
    %c0_67 = arith.constant 0 : index
    %208 = vector.load %arg4[%c0_66, %c0_67] : memref<128x128xf32, #tpu.memory_space<vmem>>, vector<128x128xf32>
    %cst_68 = arith.constant dense<0.000000e+00> : vector<8x128xf32>
    %209 = tpu.matmul %189, %208, %cst_68 {dimension_numbers = #tpu.dot_dimension_numbers<[1], [0], [0], [1], [0, 0, 1, 1], [], []>} : vector<8x128xf32>, vector<128x128xf32>, vector<8x128xf32> -> vector<8x128xf32>
    %210 = arith.addf %207, %209 : vector<8x128xf32>
    %211 = math.tanh %210 : vector<8x128xf32>
    %212 = arith.negf %210 : vector<8x128xf32>
    %213 = math.exp %212 : vector<8x128xf32>
    %cst_69 = arith.constant 1.000000e+00 : f32
    %214 = vector.broadcast %cst_69 : f32 to vector<8x128xf32>
    %215 = arith.addf %214, %213 : vector<8x128xf32>
    %216 = arith.divf %214, %215 : vector<8x128xf32>
    %217 = arith.select %19, %211, %216 : vector<8x128xi1>, vector<8x128xf32>
    %c96_i32_70 = arith.constant 96 : i32
    %218 = tpu.dynamic_rotate %217 by %c96_i32_70 dim 1 : vector<8x128xf32>, i32 -> vector<8x128xf32>
    %c64_i32_71 = arith.constant 64 : i32
    %219 = tpu.dynamic_rotate %217 by %c64_i32_71 dim 1 : vector<8x128xf32>, i32 -> vector<8x128xf32>
    %c32_i32_72 = arith.constant 32 : i32
    %220 = tpu.dynamic_rotate %217 by %c32_i32_72 dim 1 : vector<8x128xf32>, i32 -> vector<8x128xf32>
    %221 = arith.mulf %218, %187 : vector<8x128xf32>
    %222 = arith.mulf %217, %219 : vector<8x128xf32>
    %223 = arith.addf %221, %222 : vector<8x128xf32>
    %224 = math.tanh %223 : vector<8x128xf32>
    %225 = arith.mulf %220, %224 : vector<8x128xf32>
    %226 = arith.mulf %225, %10 : vector<8x128xf32>
    %cst_73 = arith.constant dense<0.000000e+00> : vector<8xf32>
    %227 = vector.multi_reduction <add>, %226, %cst_73 [1] : vector<8x128xf32> to vector<8xf32>
    %228 = vector.shape_cast %227 : vector<8xf32> to vector<8x1xf32>
    %229 = vector.broadcast %c5_i32 : i32 to vector<8x1xi32>
    %230 = arith.cmpi slt, %229, %7 : vector<8x1xi32>
    %231 = arith.extui %230 : vector<8x1xi1> to vector<8x1xi32>
    %232 = arith.sitofp %231 : vector<8x1xi32> to vector<8x1xf32>
    %233 = arith.mulf %228, %232 : vector<8x1xf32>
    %234 = arith.addf %233, %13 : vector<8x1xf32>
    %235 = vector.broadcast %c5_i32 : i32 to vector<8x128xi32>
    %236 = arith.cmpi eq, %20, %235 : vector<8x128xi32>
    %237 = vector.shape_cast %234 : vector<8x1xf32> to vector<8x1xf32>
    %238 = vector.broadcast %237 : vector<8x1xf32> to vector<8x128xf32>
    %239 = arith.select %236, %238, %203 : vector<8x128xi1>, vector<8x128xf32>
    %c6_i32 = arith.constant 6 : i32
    %c8_i32_74 = arith.constant 8 : i32
    %240 = arith.muli %c6_i32, %c8_i32_74 : i32
    %241 = tpu.assume_multiple %240, 8 : i32
    %242 = arith.index_cast %241 : i32 to index
    %c0_75 = arith.constant 0 : index
    %243 = vector.load %arg9[%242, %c0_75] : memref<64x128xf32, #tpu.memory_space<vmem>>, vector<8x128xf32>
    %c0_76 = arith.constant 0 : index
    %c0_77 = arith.constant 0 : index
    %244 = vector.load %arg4[%c0_76, %c0_77] : memref<128x128xf32, #tpu.memory_space<vmem>>, vector<128x128xf32>
    %cst_78 = arith.constant dense<0.000000e+00> : vector<8x128xf32>
    %245 = tpu.matmul %225, %244, %cst_78 {dimension_numbers = #tpu.dot_dimension_numbers<[1], [0], [0], [1], [0, 0, 1, 1], [], []>} : vector<8x128xf32>, vector<128x128xf32>, vector<8x128xf32> -> vector<8x128xf32>
    %246 = arith.addf %243, %245 : vector<8x128xf32>
    %247 = math.tanh %246 : vector<8x128xf32>
    %248 = arith.negf %246 : vector<8x128xf32>
    %249 = math.exp %248 : vector<8x128xf32>
    %cst_79 = arith.constant 1.000000e+00 : f32
    %250 = vector.broadcast %cst_79 : f32 to vector<8x128xf32>
    %251 = arith.addf %250, %249 : vector<8x128xf32>
    %252 = arith.divf %250, %251 : vector<8x128xf32>
    %253 = arith.select %19, %247, %252 : vector<8x128xi1>, vector<8x128xf32>
    %c96_i32_80 = arith.constant 96 : i32
    %254 = tpu.dynamic_rotate %253 by %c96_i32_80 dim 1 : vector<8x128xf32>, i32 -> vector<8x128xf32>
    %c64_i32_81 = arith.constant 64 : i32
    %255 = tpu.dynamic_rotate %253 by %c64_i32_81 dim 1 : vector<8x128xf32>, i32 -> vector<8x128xf32>
    %c32_i32_82 = arith.constant 32 : i32
    %256 = tpu.dynamic_rotate %253 by %c32_i32_82 dim 1 : vector<8x128xf32>, i32 -> vector<8x128xf32>
    %257 = arith.mulf %254, %223 : vector<8x128xf32>
    %258 = arith.mulf %253, %255 : vector<8x128xf32>
    %259 = arith.addf %257, %258 : vector<8x128xf32>
    %260 = math.tanh %259 : vector<8x128xf32>
    %261 = arith.mulf %256, %260 : vector<8x128xf32>
    %262 = arith.mulf %261, %10 : vector<8x128xf32>
    %cst_83 = arith.constant dense<0.000000e+00> : vector<8xf32>
    %263 = vector.multi_reduction <add>, %262, %cst_83 [1] : vector<8x128xf32> to vector<8xf32>
    %264 = vector.shape_cast %263 : vector<8xf32> to vector<8x1xf32>
    %265 = vector.broadcast %c6_i32 : i32 to vector<8x1xi32>
    %266 = arith.cmpi slt, %265, %7 : vector<8x1xi32>
    %267 = arith.extui %266 : vector<8x1xi1> to vector<8x1xi32>
    %268 = arith.sitofp %267 : vector<8x1xi32> to vector<8x1xf32>
    %269 = arith.mulf %264, %268 : vector<8x1xf32>
    %270 = arith.addf %269, %13 : vector<8x1xf32>
    %271 = vector.broadcast %c6_i32 : i32 to vector<8x128xi32>
    %272 = arith.cmpi eq, %20, %271 : vector<8x128xi32>
    %273 = vector.shape_cast %270 : vector<8x1xf32> to vector<8x1xf32>
    %274 = vector.broadcast %273 : vector<8x1xf32> to vector<8x128xf32>
    %275 = arith.select %272, %274, %239 : vector<8x128xi1>, vector<8x128xf32>
    %c7_i32 = arith.constant 7 : i32
    %c8_i32_84 = arith.constant 8 : i32
    %276 = arith.muli %c7_i32, %c8_i32_84 : i32
    %277 = tpu.assume_multiple %276, 8 : i32
    %278 = arith.index_cast %277 : i32 to index
    %c0_85 = arith.constant 0 : index
    %279 = vector.load %arg9[%278, %c0_85] : memref<64x128xf32, #tpu.memory_space<vmem>>, vector<8x128xf32>
    %c0_86 = arith.constant 0 : index
    %c0_87 = arith.constant 0 : index
    %280 = vector.load %arg4[%c0_86, %c0_87] : memref<128x128xf32, #tpu.memory_space<vmem>>, vector<128x128xf32>
    %cst_88 = arith.constant dense<0.000000e+00> : vector<8x128xf32>
    %281 = tpu.matmul %261, %280, %cst_88 {dimension_numbers = #tpu.dot_dimension_numbers<[1], [0], [0], [1], [0, 0, 1, 1], [], []>} : vector<8x128xf32>, vector<128x128xf32>, vector<8x128xf32> -> vector<8x128xf32>
    %282 = arith.addf %279, %281 : vector<8x128xf32>
    %283 = math.tanh %282 : vector<8x128xf32>
    %284 = arith.negf %282 : vector<8x128xf32>
    %285 = math.exp %284 : vector<8x128xf32>
    %cst_89 = arith.constant 1.000000e+00 : f32
    %286 = vector.broadcast %cst_89 : f32 to vector<8x128xf32>
    %287 = arith.addf %286, %285 : vector<8x128xf32>
    %288 = arith.divf %286, %287 : vector<8x128xf32>
    %289 = arith.select %19, %283, %288 : vector<8x128xi1>, vector<8x128xf32>
    %c96_i32_90 = arith.constant 96 : i32
    %290 = tpu.dynamic_rotate %289 by %c96_i32_90 dim 1 : vector<8x128xf32>, i32 -> vector<8x128xf32>
    %c64_i32_91 = arith.constant 64 : i32
    %291 = tpu.dynamic_rotate %289 by %c64_i32_91 dim 1 : vector<8x128xf32>, i32 -> vector<8x128xf32>
    %c32_i32_92 = arith.constant 32 : i32
    %292 = tpu.dynamic_rotate %289 by %c32_i32_92 dim 1 : vector<8x128xf32>, i32 -> vector<8x128xf32>
    %293 = arith.mulf %290, %259 : vector<8x128xf32>
    %294 = arith.mulf %289, %291 : vector<8x128xf32>
    %295 = arith.addf %293, %294 : vector<8x128xf32>
    %296 = math.tanh %295 : vector<8x128xf32>
    %297 = arith.mulf %292, %296 : vector<8x128xf32>
    %298 = arith.mulf %297, %10 : vector<8x128xf32>
    %cst_93 = arith.constant dense<0.000000e+00> : vector<8xf32>
    %299 = vector.multi_reduction <add>, %298, %cst_93 [1] : vector<8x128xf32> to vector<8xf32>
    %300 = vector.shape_cast %299 : vector<8xf32> to vector<8x1xf32>
    %301 = vector.broadcast %c7_i32 : i32 to vector<8x1xi32>
    %302 = arith.cmpi slt, %301, %7 : vector<8x1xi32>
    %303 = arith.extui %302 : vector<8x1xi1> to vector<8x1xi32>
    %304 = arith.sitofp %303 : vector<8x1xi32> to vector<8x1xf32>
    %305 = arith.mulf %300, %304 : vector<8x1xf32>
    %306 = arith.addf %305, %13 : vector<8x1xf32>
    %307 = vector.broadcast %c7_i32 : i32 to vector<8x128xi32>
    %308 = arith.cmpi eq, %20, %307 : vector<8x128xi32>
    %309 = vector.shape_cast %306 : vector<8x1xf32> to vector<8x1xf32>
    %310 = vector.broadcast %309 : vector<8x1xf32> to vector<8x128xf32>
    %311 = arith.select %308, %310, %275 : vector<8x128xi1>, vector<8x128xf32>
    %c8_i32_94 = arith.constant 8 : i32
    %c0_95 = arith.constant 0 : index
    %c0_96 = arith.constant 0 : index
    %312 = vector.load %arg8[%c0_95, %c0_96] : memref<8x128xf32, #tpu.memory_space<vmem>>, vector<8x128xf32>
    tpu.vector_store %arg8[%c0_95, %c0_96], %311 {strides = array<i32>} : memref<8x128xf32, #tpu.memory_space<vmem>>, vector<8x128xf32>,
    return
  }
  func.func @transform_0(%arg0: i32) -> (i32, i32) {
    %c0_i32 = arith.constant 0 : i32
    %c0_i32_0 = arith.constant 0 : i32
    %c0_i32_1 = arith.constant 0 : i32
    return %c0_i32, %c0_i32_0 : i32, i32
  }
  func.func @transform_1(%arg0: i32) -> (i32, i32) {
    %c0_i32 = arith.constant 0 : i32
    %c0_i32_0 = arith.constant 0 : i32
    %c0_i32_1 = arith.constant 0 : i32
    return %c0_i32, %c0_i32_0 : i32, i32
  }
  func.func @transform_2(%arg0: i32) -> (i32, i32) {
    %c0_i32 = arith.constant 0 : i32
    %c0_i32_0 = arith.constant 0 : i32
    %c0_i32_1 = arith.constant 0 : i32
    return %c0_i32, %c0_i32_0 : i32, i32
  }
  func.func @transform_3(%arg0: i32) -> (i32, i32) {
    %c0_i32 = arith.constant 0 : i32
    %c0_i32_0 = arith.constant 0 : i32
    %c0_i32_1 = arith.constant 0 : i32
    return %c0_i32, %c0_i32_0 : i32, i32
  }
  func.func @transform_4(%arg0: i32) -> (i32, i32) {
    %c0_i32 = arith.constant 0 : i32
    %c0_i32_0 = arith.constant 0 : i32
    %c0_i32_1 = arith.constant 0 : i32
    return %c0_i32, %c0_i32_0 : i32, i32
  }
  func.func @transform_5(%arg0: i32) -> (i32, i32) {
    %c0_i32 = arith.constant 0 : i32
    %c0_i32_0 = arith.constant 0 : i32
    %c0_i32_1 = arith.constant 0 : i32
    return %c0_i32, %c0_i32_0 : i32, i32
  }
  func.func @transform_6(%arg0: i32) -> (i32, i32) {
    %c0_i32 = arith.constant 0 : i32
    %c0_i32_0 = arith.constant 0 : i32
    %c0_i32_1 = arith.constant 0 : i32
    return %c0_i32, %c0_i32_0 : i32, i32
  }
  func.func @transform_7(%arg0: i32) -> (i32, i32) {
    %c0_i32 = arith.constant 0 : i32
    %c0_i32_0 = arith.constant 0 : i32
    %c0_i32_1 = arith.constant 0 : i32
    return %c0_i32, %c0_i32_0 : i32, i32
  }
}

</mosaic_0001>

<llo_original>
// kernel: vad_forward.1
$region0: #{vad_forward.1}
  #allocation0 [shape = 'u32[]', space=smem, size = 0x4, offset = 0x4, fixed_abs, tag = 'smem constant byte address 0x4 - core index']
  #allocation1 [shape = 'u32[144,128]{1,0:T(1,128)}', space=vmem, size = 0x12000, scoped, tag = 'internal scratch']
  #allocation2 [shape = 'f32[64,128]{1,0:T(8,128)}', space=vmem, size = 0x8000, scoped, tag = 'scratch operand']
  #allocation3 [shape = 'f32[1,1]{1,0:T(1,128)S(1)}', space=vmem, size = 0x200, scoped, tag = 'scoped memory for vad_forward.1']
  %s0 = inlined_call_operand.vmem [shape: f32[64,16], index: 0, kind: input, shape index: {}]
  %s1 = inlined_call_operand.vmem [shape: s32[8,1], index: 1, kind: input, shape index: {}]
  %s2 = inlined_call_operand.vmem [shape: f32[16,128], index: 2, kind: input, shape index: {}]
  %s3 = inlined_call_operand.vmem [shape: f32[128,128], index: 3, kind: input, shape index: {}]
  %s4 = inlined_call_operand.vmem [shape: f32[1,128], index: 4, kind: input, shape index: {}]
  %s5 = inlined_call_operand.vmem [shape: f32[1,128], index: 5, kind: input, shape index: {}]
  %s6 = inlined_call_operand.<no memory space> [shape: f32[1,1], index: 6, kind: input, shape index: {}]
  %s7 = inlined_call_operand.vmem [shape: f32[8,128], index: 7, kind: output, shape index: {}]
  %s8 = sld [smem:[#allocation0]]
  $region38: #{vad_forward.1} parent=0
    _
  %s10 = ssub.s32 1, %s8
  %s11 = scalar_select 0, %s10, %s8
  %v12 = vstv %s6
  %13 = vst [vmem:[#allocation3] sm:$0x1] %v12
  // Predicated region
  $region2: #{vad_forward.1} parent=0 // pred_check
    _
  $region3: #{vad_forward.1} parent=0 // pred_check_branch
    %15 = sbr.rel (0) target = $region5
  $region4: #{vad_forward.1} parent=0 // pred_region
    _
  $region5: #{vad_forward.1} parent=0 // pred_fallthru
    _
  // Predicated region
  $region6: #{vad_forward.1} parent=0 // pred_check
    _
  $region7: #{vad_forward.1} parent=0 // pred_check_branch
    %17 = sbr.rel (0) target = $region9
  $region8: #{vad_forward.1} parent=0 // pred_region
    _
  $region9: #{vad_forward.1} parent=0 // pred_fallthru
    _
  // Predicated region
  $region10: #{vad_forward.1} parent=0 // pred_check
    _
  $region11: #{vad_forward.1} parent=0 // pred_check_branch
    %19 = sbr.rel (0) target = $region13
  $region12: #{vad_forward.1} parent=0 // pred_region
    _
  $region13: #{vad_forward.1} parent=0 // pred_fallthru
    _
  // Predicated region
  $region14: #{vad_forward.1} parent=0 // pred_check
    _
  $region15: #{vad_forward.1} parent=0 // pred_check_branch
    %21 = sbr.rel (0) target = $region17
  $region16: #{vad_forward.1} parent=0 // pred_region
    _
  $region17: #{vad_forward.1} parent=0 // pred_fallthru
    _
  // Predicated region
  $region18: #{vad_forward.1} parent=0 // pred_check
    _
  $region19: #{vad_forward.1} parent=0 // pred_check_branch
    %23 = sbr.rel (0) target = $region21
  $region20: #{vad_forward.1} parent=0 // pred_region
    _
  $region21: #{vad_forward.1} parent=0 // pred_fallthru
    _
  // Predicated region
  $region22: #{vad_forward.1} parent=0 // pred_check
    _
  $region23: #{vad_forward.1} parent=0 // pred_check_branch
    %25 = sbr.rel (0) target = $region25
  $region24: #{vad_forward.1} parent=0 // pred_region
    _
  $region25: #{vad_forward.1} parent=0 // pred_fallthru
    _
  // Predicated region
  $region26: #{vad_forward.1} parent=0 // pred_check
    _
  $region27: #{vad_forward.1} parent=0 // pred_check_branch
    %27 = sbr.rel (0) target = $region29
  $region28: #{vad_forward.1} parent=0 // pred_region
    _
  $region29: #{vad_forward.1} parent=0 // pred_fallthru
    _
  %v28 = vld [vmem:[%s0] sm:$0xff]
  %v29 = vld [vmem:[%s0 + $0x8] sm:$0xff]
  %v30 = vld [vmem:[%s0 + $0x10] sm:$0xff]
  %v31 = vld [vmem:[%s0 + $0x18] sm:$0xff]
  %v32 = vld [vmem:[%s0 + $0x20] sm:$0xff]
  %v33 = vld [vmem:[%s0 + $0x28] sm:$0xff]
  %v34 = vld [vmem:[%s0 + $0x30] sm:$0xff]
  %v35 = vld [vmem:[%s0 + $0x38] sm:$0xff]
  %v36 = vld [vmem:[%s2] sm:$0xff]
  %v37 = vld [vmem:[%s2 + $0x8] sm:$0xff]
  %v38 = vld [vmem:[%s4] sm:$0x1]
  %v40 = vlaneseq
  %v41 = vshrl.u32 %v40, 7
  %v42 = vsub.s32 0, %v41
  %v43 = vrot.slane %v38, %v42
  %vm45 = vcmask 130048
  %v47 = vsel %vm45, %v28, 0
  %v50 = vsel %vm45, %v29, 0
  %v53 = vsel %vm45, %v30, 0
  %v56 = vsel %vm45, %v31, 0
  %v59 = vsel %vm45, %v32, 0
  %v62 = vsel %vm45, %v33, 0
  %v65 = vsel %vm45, %v34, 0
  %v68 = vsel %vm45, %v35, 0
  %70 = vmatprep.subr.mxu0 0.0
  %71 = vmatpush1.msra.mxu0 0.0
  %72 = vmatprep.subr.mxu0 0.0
  %73 = vmatpush1.msra.mxu0 0.0
  %74 = vmatprep.subr.mxu0 0.0
  %75 = vmatpush1.msra.mxu0 0.0
  %76 = vmatprep.subr.mxu0 0.0
  %77 = vmatpush1.msra.mxu0 0.0
  %78 = vmatprep.subr.mxu0 0.0
  %79 = vmatpush1.msra.mxu0 0.0
  %80 = vmatprep.subr.mxu0 0.0
  %81 = vmatpush1.msra.mxu0 0.0
  %82 = vmatprep.subr.mxu0 0.0
  %83 = vmatpush1.msra.mxu0 0.0
  %84 = vmatprep.subr.mxu0 0.0
  %85 = vmatpush1.msra.mxu0 0.0
  %86 = vmatprep.subr.mxu0 0.0
  %87 = vmatpush1.msra.mxu0 0.0
  %88 = vmatprep.subr.mxu0 0.0
  %89 = vmatpush1.msra.mxu0 0.0
  %90 = vmatprep.subr.mxu0 0.0
  %91 = vmatpush1.msra.mxu0 0.0
  %92 = vmatprep.subr.mxu0 0.0
  %93 = vmatpush1.msra.mxu0 0.0
  %94 = vmatprep.subr.mxu0 0.0
  %95 = vmatpush1.msra.mxu0 0.0
  %96 = vmatprep.subr.mxu0 0.0
  %97 = vmatpush1.msra.mxu0 0.0
  %98 = vmatprep.subr.mxu0 0.0
  %99 = vmatpush1.msra.mxu0 %v37
  %100 = vmatprep.subr.mxu0 0.0
  %101 = vmatpush1.msra.mxu0 %v36
  %102 = vmatprep.subr.mxu0 0.0
  %103 = vmatpush2.msra.mxu0 0.0
  %104 = vmatprep.subr.mxu0 0.0
  %105 = vmatpush2.msra.mxu0 0.0
  %106 = vmatprep.subr.mxu0 0.0
  %107 = vmatpush2.msra.mxu0 0.0
  %108 = vmatprep.subr.mxu0 0.0
  %109 = vmatpush2.msra.mxu0 0.0
  %110 = vmatprep.subr.mxu0 0.0
  %111 = vmatpush2.msra.mxu0 0.0
  %112 = vmatprep.subr.mxu0 0.0
  %113 = vmatpush2.msra.mxu0 0.0
  %114 = vmatprep.subr.mxu0 0.0
  %115 = vmatpush2.msra.mxu0 0.0
  %116 = vmatprep.subr.mxu0 0.0
  %117 = vmatpush2.msra.mxu0 0.0
  %118 = vmatprep.subr.mxu0 0.0
  %119 = vmatpush2.msra.mxu0 0.0
  %120 = vmatprep.subr.mxu0 0.0
  %121 = vmatpush2.msra.mxu0 0.0
  %122 = vmatprep.subr.mxu0 0.0
  %123 = vmatpush2.msra.mxu0 0.0
  %124 = vmatprep.subr.mxu0 0.0
  %125 = vmatpush2.msra.mxu0 0.0
  %126 = vmatprep.subr.mxu0 0.0
  %127 = vmatpush2.msra.mxu0 0.0
  %128 = vmatprep.subr.mxu0 0.0
  %129 = vmatpush2.msra.mxu0 0.0
  %130 = vmatprep.subr.mxu0 0.0
  %131 = vmatpush2.msra.mxu0 0.0
  %132 = vmatprep.subr.mxu0 0.0
  %133 = vmatpush2.msra.mxu0 0.0
  %134 = vmatprep.mubr.f32.mxu0 0.0
  %135 = vmatmul.mubr.f32.gmra.mxu0 %v47
  %v136 = vpop.f32.mrf.mxu0
  %v137 = vadd.f32 %v43, %v136
  %v138 = vpop.f32.mrf.mxu0
  %139 = vmatprep.mubr.f32.mxu0 0.0
  %140 = vmatmul.mubr.f32.gmra.mxu0 %v50
  %v141 = vpop.f32.mrf.mxu0
  %v142 = vadd.f32 %v43, %v141
  %v143 = vpop.f32.mrf.mxu0
  %144 = vmatprep.mubr.f32.mxu0 0.0
  %145 = vmatmul.mubr.f32.gmra.mxu0 %v53
  %v146 = vpop.f32.mrf.mxu0
  %v147 = vadd.f32 %v43, %v146
  %v148 = vpop.f32.mrf.mxu0
  %149 = vmatprep.mubr.f32.mxu0 0.0
  %150 = vmatmul.mubr.f32.gmra.mxu0 %v56
  %v151 = vpop.f32.mrf.mxu0
  %v152 = vadd.f32 %v43, %v151
  %v153 = vpop.f32.mrf.mxu0
  %154 = vmatprep.mubr.f32.mxu0 0.0
  %155 = vmatmul.mubr.f32.gmra.mxu0 %v59
  %v156 = vpop.f32.mrf.mxu0
  %v157 = vadd.f32 %v43, %v156
  %v158 = vpop.f32.mrf.mxu0
  %159 = vmatprep.mubr.f32.mxu0 0.0
  %160 = vmatmul.mubr.f32.gmra.mxu0 %v62
  %v161 = vpop.f32.mrf.mxu0
  %v162 = vadd.f32 %v43, %v161
  %v163 = vpop.f32.mrf.mxu0
  %164 = vmatprep.mubr.f32.mxu0 0.0
  %165 = vmatmul.mubr.f32.gmra.mxu0 %v65
  %v166 = vpop.f32.mrf.mxu0
  %v167 = vadd.f32 %v43, %v166
  %v168 = vpop.f32.mrf.mxu0
  %169 = vmatprep.mubr.f32.mxu0 0.0
  %170 = vmatmul.mubr.f32.gmra.mxu0 %v68
  %v171 = vpop.f32.mrf.mxu0
  %v172 = vadd.f32 %v43, %v171
  %v173 = vpop.f32.mrf.mxu0
  %174 = vdwg.mxu0
  %175 = vst [vmem:[#allocation2] sm:$0xff] %v137
  %176 = vst [vmem:[#allocation2 + $0x8] sm:$0xff] %v142
  %177 = vst [vmem:[#allocation2 + $0x10] sm:$0xff] %v147
  %178 = vst [vmem:[#allocation2 + $0x18] sm:$0xff] %v152
  %179 = vst [vmem:[#allocation2 + $0x20] sm:$0xff] %v157
  %180 = vst [vmem:[#allocation2 + $0x28] sm:$0xff] %v162
  %181 = vst [vmem:[#allocation2 + $0x30] sm:$0xff] %v167
  %182 = vst [vmem:[#allocation2 + $0x38] sm:$0xff] %v172
  %v183 = vld [vmem:[%s1] sm:$0xff]
  %v184 = vld [vmem:[%s5] sm:$0x1]
  %v186 = vlaneseq
  %v187 = vshrl.u32 %v186, 7
  %v188 = vsub.s32 0, %v187
  %v189 = vrot.slane %v184, %v188
  %v191 = vld [vmem:[#allocation3] sm:$0x1]
  %v193 = vlaneseq
  %v194 = vshrl.u32 %v193, 7
  %v195 = vsub.s32 0, %v194
  %v196 = vrot.slane %v191, %v195
  %v198 = vlaneseq
  %v199 = vand.u32 %v198, 127
  %vm200 = vcmp.ge.s32.totalorder %v199, 64
  %vm201 = vcmp.lt.s32.totalorder %v199, 96
  %vm202 = vmand %vm200, %vm201
  %v203 = vld [vmem:[#allocation2] sm:$0xff]
  %v204 = vld [vmem:[%s3] sm:$0xff]
  %v205 = vld [vmem:[%s3 + $0x8] sm:$0xff]
  %v206 = vld [vmem:[%s3 + $0x10] sm:$0xff]
  %v207 = vld [vmem:[%s3 + $0x18] sm:$0xff]
  %v208 = vld [vmem:[%s3 + $0x20] sm:$0xff]
  %v209 = vld [vmem:[%s3 + $0x28] sm:$0xff]
  %v210 = vld [vmem:[%s3 + $0x30] sm:$0xff]
  %v211 = vld [vmem:[%s3 + $0x38] sm:$0xff]
  %v212 = vld [vmem:[%s3 + $0x40] sm:$0xff]
  %v213 = vld [vmem:[%s3 + $0x48] sm:$0xff]
  %v214 = vld [vmem:[%s3 + $0x50] sm:$0xff]
  %v215 = vld [vmem:[%s3 + $0x58] sm:$0xff]
  %v216 = vld [vmem:[%s3 + $0x60] sm:$0xff]
  %v217 = vld [vmem:[%s3 + $0x68] sm:$0xff]
  %v218 = vld [vmem:[%s3 + $0x70] sm:$0xff]
  %v219 = vld [vmem:[%s3 + $0x78] sm:$0xff]
  %220 = vmatprep.subr.mxu0 0.0
  %221 = vmatpush1.msra.mxu0 %v219
  %222 = vmatprep.subr.mxu0 0.0
  %223 = vmatpush1.msra.mxu0 %v218
  %224 = vmatprep.subr.mxu0 0.0
  %225 = vmatpush1.msra.mxu0 %v217
  %226 = vmatprep.subr.mxu0 0.0
  %227 = vmatpush1.msra.mxu0 %v216
  %228 = vmatprep.subr.mxu0 0.0
  %229 = vmatpush1.msra.mxu0 %v215
  %230 = vmatprep.subr.mxu0 0.0
  %231 = vmatpush1.msra.mxu0 %v214
  %232 = vmatprep.subr.mxu0 0.0
  %233 = vmatpush1.msra.mxu0 %v213
  %234 = vmatprep.subr.mxu0 0.0
  %235 = vmatpush1.msra.mxu0 %v212
  %236 = vmatprep.subr.mxu0 0.0
  %237 = vmatpush1.msra.mxu0 %v211
  %238 = vmatprep.subr.mxu0 0.0
  %239 = vmatpush1.msra.mxu0 %v210
  %240 = vmatprep.subr.mxu0 0.0
  %241 = vmatpush1.msra.mxu0 %v209
  %242 = vmatprep.subr.mxu0 0.0
  %243 = vmatpush1.msra.mxu0 %v208
  %244 = vmatprep.subr.mxu0 0.0
  %245 = vmatpush1.msra.mxu0 %v207
  %246 = vmatprep.subr.mxu0 0.0
  %247 = vmatpush1.msra.mxu0 %v206
  %248 = vmatprep.subr.mxu0 0.0
  %249 = vmatpush1.msra.mxu0 %v205
  %250 = vmatprep.subr.mxu0 0.0
  %251 = vmatpush1.msra.mxu0 %v204
  %252 = vmatprep.subr.mxu0 0.0
  %253 = vmatpush2.msra.mxu0 0.0
  %254 = vmatprep.subr.mxu0 0.0
  %255 = vmatpush2.msra.mxu0 0.0
  %256 = vmatprep.subr.mxu0 0.0
  %257 = vmatpush2.msra.mxu0 0.0
  %258 = vmatprep.subr.mxu0 0.0
  %259 = vmatpush2.msra.mxu0 0.0
  %260 = vmatprep.subr.mxu0 0.0
  %261 = vmatpush2.msra.mxu0 0.0
  %262 = vmatprep.subr.mxu0 0.0
  %263 = vmatpush2.msra.mxu0 0.0
  %264 = vmatprep.subr.mxu0 0.0
  %265 = vmatpush2.msra.mxu0 0.0
  %266 = vmatprep.subr.mxu0 0.0
  %267 = vmatpush2.msra.mxu0 0.0
  %268 = vmatprep.subr.mxu0 0.0
  %269 = vmatpush2.msra.mxu0 0.0
  %270 = vmatprep.subr.mxu0 0.0
  %271 = vmatpush2.msra.mxu0 0.0
  %272 = vmatprep.subr.mxu0 0.0
  %273 = vmatpush2.msra.mxu0 0.0
  %274 = vmatprep.subr.mxu0 0.0
  %275 = vmatpush2.msra.mxu0 0.0
  %276 = vmatprep.subr.mxu0 0.0
  %277 = vmatpush2.msra.mxu0 0.0
  %278 = vmatprep.subr.mxu0 0.0
  %279 = vmatpush2.msra.mxu0 0.0
  %280 = vmatprep.subr.mxu0 0.0
  %281 = vmatpush2.msra.mxu0 0.0
  %282 = vmatprep.subr.mxu0 0.0
  %283 = vmatpush2.msra.mxu0 0.0
  %284 = vmatprep.mubr.f32.mxu0 0.0
  %285 = vmatmul.mubr.f32.gmra.mxu0 0.0
  %v286 = vpop.f32.mrf.mxu0
  %v287 = vadd.f32 0.0, %v286
  %v288 = vpop.f32.mrf.mxu0
  %289 = vdwg.mxu0
  %v290 = vadd.f32 %v203, %v287
  %v291 = vtanh.pop %v290
  %v292 = vxor.u32 %v290, 2147483648
  %v293 = vmul.f32 %v292, 1.442695
  %v294 = vpow.pop %v293
  %v295 = vadd.f32 %v294, 1.0
  %v296 = vrcp.pop %v295
  %v297 = vmul.f32 1.0, %v296
  %v298 = vsel %vm202, %v291, %v297
  %299 = vrot.lane.b32.xlu0 %v298, 96
  %v300 = vpop.permute.xlu0 %299
  %301 = vrot.lane.b32.xlu0 %v298, 64
  %v302 = vpop.permute.xlu0 %301
  %303 = vrot.lane.b32.xlu0 %v298, 32
  %v304 = vpop.permute.xlu0 %303
  %v305 = vmul.f32 %v300, 0.0
  %v306 = vmul.f32 %v298, %v302
  %v307 = vadd.f32 %v305, %v306
  %v308 = vtanh.pop %v307
  %v309 = vmul.f32 %v304, %v308
  %v310 = vmul.f32 %v309, %v189
  %311 = vadd.xlane.f32.xlu0 %v310
  %v312 = vpop.xlane.xlu0 %311
  %vm313 = vcmp.gt.s32.totalorder %v183, 0
  %v314 = vsel %vm313, 1, 0
  %v315 = vcvt.s32.f32 %v314
  %v316 = vmul.f32 %v312, %v315
  %v317 = vadd.f32 %v316, %v196
  %vm318 = vcmp.eq.s32.totalorder %v199, 0
  %320 = vset.pattern.permute.xlu0 0
  %321 = vperm.xlu0 %320, %v317
  %v322 = vpop.permute.xlu0 %321
  %v324 = vsel %vm318, %v322, 0.0
  %s325 = scalar_lea.vmem [#allocation2], 8
  %v326 = vld [vmem:[%s325] sm:$0xff]
  %327 = vmatprep.subr.mxu0 0.0
  %328 = vmatpush1.msra.mxu0 %v219
  %329 = vmatprep.subr.mxu0 0.0
  %330 = vmatpush1.msra.mxu0 %v218
  %331 = vmatprep.subr.mxu0 0.0
  %332 = vmatpush1.msra.mxu0 %v217
  %333 = vmatprep.subr.mxu0 0.0
  %334 = vmatpush1.msra.mxu0 %v216
  %335 = vmatprep.subr.mxu0 0.0
  %336 = vmatpush1.msra.mxu0 %v215
  %337 = vmatprep.subr.mxu0 0.0
  %338 = vmatpush1.msra.mxu0 %v214
  %339 = vmatprep.subr.mxu0 0.0
  %340 = vmatpush1.msra.mxu0 %v213
  %341 = vmatprep.subr.mxu0 0.0
  %342 = vmatpush1.msra.mxu0 %v212
  %343 = vmatprep.subr.mxu0 0.0
  %344 = vmatpush1.msra.mxu0 %v211
  %345 = vmatprep.subr.mxu0 0.0
  %346 = vmatpush1.msra.mxu0 %v210
  %347 = vmatprep.subr.mxu0 0.0
  %348 = vmatpush1.msra.mxu0 %v209
  %349 = vmatprep.subr.mxu0 0.0
  %350 = vmatpush1.msra.mxu0 %v208
  %351 = vmatprep.subr.mxu0 0.0
  %352 = vmatpush1.msra.mxu0 %v207
  %353 = vmatprep.subr.mxu0 0.0
  %354 = vmatpush1.msra.mxu0 %v206
  %355 = vmatprep.subr.mxu0 0.0
  %356 = vmatpush1.msra.mxu0 %v205
  %357 = vmatprep.subr.mxu0 0.0
  %358 = vmatpush1.msra.mxu0 %v204
  %359 = vmatprep.subr.mxu0 0.0
  %360 = vmatpush2.msra.mxu0 0.0
  %361 = vmatprep.subr.mxu0 0.0
  %362 = vmatpush2.msra.mxu0 0.0
  %363 = vmatprep.subr.mxu0 0.0
  %364 = vmatpush2.msra.mxu0 0.0
  %365 = vmatprep.subr.mxu0 0.0
  %366 = vmatpush2.msra.mxu0 0.0
  %367 = vmatprep.subr.mxu0 0.0
  %368 = vmatpush2.msra.mxu0 0.0
  %369 = vmatprep.subr.mxu0 0.0
  %370 = vmatpush2.msra.mxu0 0.0
  %371 = vmatprep.subr.mxu0 0.0
  %372 = vmatpush2.msra.mxu0 0.0
  %373 = vmatprep.subr.mxu0 0.0
  %374 = vmatpush2.msra.mxu0 0.0
  %375 = vmatprep.subr.mxu0 0.0
  %376 = vmatpush2.msra.mxu0 0.0
  %377 = vmatprep.subr.mxu0 0.0
  %378 = vmatpush2.msra.mxu0 0.0
  %379 = vmatprep.subr.mxu0 0.0
  %380 = vmatpush2.msra.mxu0 0.0
  %381 = vmatprep.subr.mxu0 0.0
  %382 = vmatpush2.msra.mxu0 0.0
  %383 = vmatprep.subr.mxu0 0.0
  %384 = vmatpush2.msra.mxu0 0.0
  %385 = vmatprep.subr.mxu0 0.0
  %386 = vmatpush2.msra.mxu0 0.0
  %387 = vmatprep.subr.mxu0 0.0
  %388 = vmatpush2.msra.mxu0 0.0
  %389 = vmatprep.subr.mxu0 0.0
  %390 = vmatpush2.msra.mxu0 0.0
  %391 = vmatprep.mubr.f32.mxu0 0.0
  %392 = vmatmul.mubr.f32.gmra.mxu0 %v309
  %v393 = vpop.f32.mrf.mxu0
  %v394 = vadd.f32 0.0, %v393
  %v395 = vpop.f32.mrf.mxu0
  %396 = vdwg.mxu0
  %v397 = vadd.f32 %v326, %v394
  %v398 = vtanh.pop %v397
  %v399 = vxor.u32 %v397, 2147483648
  %v400 = vmul.f32 %v399, 1.442695
  %v401 = vpow.pop %v400
  %v402 = vadd.f32 %v401, 1.0
  %v403 = vrcp.pop %v402
  %v404 = vmul.f32 1.0, %v403
  %v405 = vsel %vm202, %v398, %v404
  %406 = vrot.lane.b32.xlu0 %v405, 96
  %v407 = vpop.permute.xlu0 %406
  %408 = vrot.lane.b32.xlu0 %v405, 64
  %v409 = vpop.permute.xlu0 %408
  %410 = vrot.lane.b32.xlu0 %v405, 32
  %v411 = vpop.permute.xlu0 %410
  %v412 = vmul.f32 %v407, %v307
  %v413 = vmul.f32 %v405, %v409
  %v414 = vadd.f32 %v412, %v413
  %v415 = vtanh.pop %v414
  %v416 = vmul.f32 %v411, %v415
  %v417 = vmul.f32 %v416, %v189
  %418 = vadd.xlane.f32.xlu0 %v417
  %v419 = vpop.xlane.xlu0 %418
  %vm420 = vcmp.gt.s32.totalorder %v183, 1
  %v421 = vsel %vm420, 1, 0
  %v422 = vcvt.s32.f32 %v421
  %v423 = vmul.f32 %v419, %v422
  %v424 = vadd.f32 %v423, %v196
  %vm425 = vcmp.eq.s32.totalorder %v199, 1
  %427 = vset.pattern.permute.xlu0 0
  %428 = vperm.xlu0 %427, %v424
  %v429 = vpop.permute.xlu0 %428
  %v431 = vsel %vm425, %v429, %v324
  %s432 = scalar_lea.vmem [#allocation2], 16
  %v433 = vld [vmem:[%s432] sm:$0xff]
  %434 = vmatprep.subr.mxu0 0.0
  %435 = vmatpush1.msra.mxu0 %v219
  %436 = vmatprep.subr.mxu0 0.0
  %437 = vmatpush1.msra.mxu0 %v218
  %438 = vmatprep.subr.mxu0 0.0
  %439 = vmatpush1.msra.mxu0 %v217
  %440 = vmatprep.subr.mxu0 0.0
  %441 = vmatpush1.msra.mxu0 %v216
  %442 = vmatprep.subr.mxu0 0.0
  %443 = vmatpush1.msra.mxu0 %v215
  %444 = vmatprep.subr.mxu0 0.0
  %445 = vmatpush1.msra.mxu0 %v214
  %446 = vmatprep.subr.mxu0 0.0
  %447 = vmatpush1.msra.mxu0 %v213
  %448 = vmatprep.subr.mxu0 0.0
  %449 = vmatpush1.msra.mxu0 %v212
  %450 = vmatprep.subr.mxu0 0.0
  %451 = vmatpush1.msra.mxu0 %v211
  %452 = vmatprep.subr.mxu0 0.0
  %453 = vmatpush1.msra.mxu0 %v210
  %454 = vmatprep.subr.mxu0 0.0
  %455 = vmatpush1.msra.mxu0 %v209
  %456 = vmatprep.subr.mxu0 0.0
  %457 = vmatpush1.msra.mxu0 %v208
  %458 = vmatprep.subr.mxu0 0.0
  %459 = vmatpush1.msra.mxu0 %v207
  %460 = vmatprep.subr.mxu0 0.0
  %461 = vmatpush1.msra.mxu0 %v206
  %462 = vmatprep.subr.mxu0 0.0
  %463 = vmatpush1.msra.mxu0 %v205
  %464 = vmatprep.subr.mxu0 0.0
  %465 = vmatpush1.msra.mxu0 %v204
  %466 = vmatprep.subr.mxu0 0.0
  %467 = vmatpush2.msra.mxu0 0.0
  %468 = vmatprep.subr.mxu0 0.0
  %469 = vmatpush2.msra.mxu0 0.0
  %470 = vmatprep.subr.mxu0 0.0
  %471 = vmatpush2.msra.mxu0 0.0
  %472 = vmatprep.subr.mxu0 0.0
  %473 = vmatpush2.msra.mxu0 0.0
  %474 = vmatprep.subr.mxu0 0.0
  %475 = vmatpush2.msra.mxu0 0.0
  %476 = vmatprep.subr.mxu0 0.0
  %477 = vmatpush2.msra.mxu0 0.0
  %478 = vmatprep.subr.mxu0 0.0
  %479 = vmatpush2.msra.mxu0 0.0
  %480 = vmatprep.subr.mxu0 0.0
  %481 = vmatpush2.msra.mxu0 0.0
  %482 = vmatprep.subr.mxu0 0.0
  %483 = vmatpush2.msra.mxu0 0.0
  %484 = vmatprep.subr.mxu0 0.0
  %485 = vmatpush2.msra.mxu0 0.0
  %486 = vmatprep.subr.mxu0 0.0
  %487 = vmatpush2.msra.mxu0 0.0
  %488 = vmatprep.subr.mxu0 0.0
  %489 = vmatpush2.msra.mxu0 0.0
  %490 = vmatprep.subr.mxu0 0.0
  %491 = vmatpush2.msra.mxu0 0.0
  %492 = vmatprep.subr.mxu0 0.0
  %493 = vmatpush2.msra.mxu0 0.0
  %494 = vmatprep.subr.mxu0 0.0
  %495 = vmatpush2.msra.mxu0 0.0
  %496 = vmatprep.subr.mxu0 0.0
  %497 = vmatpush2.msra.mxu0 0.0
  %498 = vmatprep.mubr.f32.mxu0 0.0
  %499 = vmatmul.mubr.f32.gmra.mxu0 %v416
  %v500 = vpop.f32.mrf.mxu0
  %v501 = vadd.f32 0.0, %v500
  %v502 = vpop.f32.mrf.mxu0
  %503 = vdwg.mxu0
  %v504 = vadd.f32 %v433, %v501
  %v505 = vtanh.pop %v504
  %v506 = vxor.u32 %v504, 2147483648
  %v507 = vmul.f32 %v506, 1.442695
  %v508 = vpow.pop %v507
  %v509 = vadd.f32 %v508, 1.0
  %v510 = vrcp.pop %v509
  %v511 = vmul.f32 1.0, %v510
  %v512 = vsel %vm202, %v505, %v511
  %513 = vrot.lane.b32.xlu0 %v512, 96
  %v514 = vpop.permute.xlu0 %513
  %515 = vrot.lane.b32.xlu0 %v512, 64
  %v516 = vpop.permute.xlu0 %515
  %517 = vrot.lane.b32.xlu0 %v512, 32
  %v518 = vpop.permute.xlu0 %517
  %v519 = vmul.f32 %v514, %v414
  %v520 = vmul.f32 %v512, %v516
  %v521 = vadd.f32 %v519, %v520
  %v522 = vtanh.pop %v521
  %v523 = vmul.f32 %v518, %v522
  %v524 = vmul.f32 %v523, %v189
  %525 = vadd.xlane.f32.xlu0 %v524
  %v526 = vpop.xlane.xlu0 %525
  %vm527 = vcmp.gt.s32.totalorder %v183, 2
  %v528 = vsel %vm527, 1, 0
  %v529 = vcvt.s32.f32 %v528
  %v530 = vmul.f32 %v526, %v529
  %v531 = vadd.f32 %v530, %v196
  %vm532 = vcmp.eq.s32.totalorder %v199, 2
  %534 = vset.pattern.permute.xlu0 0
  %535 = vperm.xlu0 %534, %v531
  %v536 = vpop.permute.xlu0 %535
  %v538 = vsel %vm532, %v536, %v431
  %s539 = scalar_lea.vmem [#allocation2], 24
  %v540 = vld [vmem:[%s539] sm:$0xff]
  %541 = vmatprep.subr.mxu0 0.0
  %542 = vmatpush1.msra.mxu0 %v219
  %543 = vmatprep.subr.mxu0 0.0
  %544 = vmatpush1.msra.mxu0 %v218
  %545 = vmatprep.subr.mxu0 0.0
  %546 = vmatpush1.msra.mxu0 %v217
  %547 = vmatprep.subr.mxu0 0.0
  %548 = vmatpush1.msra.mxu0 %v216
  %549 = vmatprep.subr.mxu0 0.0
  %550 = vmatpush1.msra.mxu0 %v215
  %551 = vmatprep.subr.mxu0 0.0
  %552 = vmatpush1.msra.mxu0 %v214
  %553 = vmatprep.subr.mxu0 0.0
  %554 = vmatpush1.msra.mxu0 %v213
  %555 = vmatprep.subr.mxu0 0.0
  %556 = vmatpush1.msra.mxu0 %v212
  %557 = vmatprep.subr.mxu0 0.0
  %558 = vmatpush1.msra.mxu0 %v211
  %559 = vmatprep.subr.mxu0 0.0
  %560 = vmatpush1.msra.mxu0 %v210
  %561 = vmatprep.subr.mxu0 0.0
  %562 = vmatpush1.msra.mxu0 %v209
  %563 = vmatprep.subr.mxu0 0.0
  %564 = vmatpush1.msra.mxu0 %v208
  %565 = vmatprep.subr.mxu0 0.0
  %566 = vmatpush1.msra.mxu0 %v207
  %567 = vmatprep.subr.mxu0 0.0
  %568 = vmatpush1.msra.mxu0 %v206
  %569 = vmatprep.subr.mxu0 0.0
  %570 = vmatpush1.msra.mxu0 %v205
  %571 = vmatprep.subr.mxu0 0.0
  %572 = vmatpush1.msra.mxu0 %v204
  %573 = vmatprep.subr.mxu0 0.0
  %574 = vmatpush2.msra.mxu0 0.0
  %575 = vmatprep.subr.mxu0 0.0
  %576 = vmatpush2.msra.mxu0 0.0
  %577 = vmatprep.subr.mxu0 0.0
  %578 = vmatpush2.msra.mxu0 0.0
  %579 = vmatprep.subr.mxu0 0.0
  %580 = vmatpush2.msra.mxu0 0.0
  %581 = vmatprep.subr.mxu0 0.0
  %582 = vmatpush2.msra.mxu0 0.0
  %583 = vmatprep.subr.mxu0 0.0
  %584 = vmatpush2.msra.mxu0 0.0
  %585 = vmatprep.subr.mxu0 0.0
  %586 = vmatpush2.msra.mxu0 0.0
  %587 = vmatprep.subr.mxu0 0.0
  %588 = vmatpush2.msra.mxu0 0.0
  %589 = vmatprep.subr.mxu0 0.0
  %590 = vmatpush2.msra.mxu0 0.0
  %591 = vmatprep.subr.mxu0 0.0
  %592 = vmatpush2.msra.mxu0 0.0
  %593 = vmatprep.subr.mxu0 0.0
  %594 = vmatpush2.msra.mxu0 0.0
  %595 = vmatprep.subr.mxu0 0.0
  %596 = vmatpush2.msra.mxu0 0.0
  %597 = vmatprep.subr.mxu0 0.0
  %598 = vmatpush2.msra.mxu0 0.0
  %599 = vmatprep.subr.mxu0 0.0
  %600 = vmatpush2.msra.mxu0 0.0
  %601 = vmatprep.subr.mxu0 0.0
  %602 = vmatpush2.msra.mxu0 0.0
  %603 = vmatprep.subr.mxu0 0.0
  %604 = vmatpush2.msra.mxu0 0.0
  %605 = vmatprep.mubr.f32.mxu0 0.0
  %606 = vmatmul.mubr.f32.gmra.mxu0 %v523
  %v607 = vpop.f32.mrf.mxu0
  %v608 = vadd.f32 0.0, %v607
  %v609 = vpop.f32.mrf.mxu0
  %610 = vdwg.mxu0
  %v611 = vadd.f32 %v540, %v608
  %v612 = vtanh.pop %v611
  %v613 = vxor.u32 %v611, 2147483648
  %v614 = vmul.f32 %v613, 1.442695
  %v615 = vpow.pop %v614
  %v616 = vadd.f32 %v615, 1.0
  %v617 = vrcp.pop %v616
  %v618 = vmul.f32 1.0, %v617
  %v619 = vsel %vm202, %v612, %v618
  %620 = vrot.lane.b32.xlu0 %v619, 96
  %v621 = vpop.permute.xlu0 %620
  %622 = vrot.lane.b32.xlu0 %v619, 64
  %v623 = vpop.permute.xlu0 %622
  %624 = vrot.lane.b32.xlu0 %v619, 32
  %v625 = vpop.permute.xlu0 %624
  %v626 = vmul.f32 %v621, %v521
  %v627 = vmul.f32 %v619, %v623
  %v628 = vadd.f32 %v626, %v627
  %v629 = vtanh.pop %v628
  %v630 = vmul.f32 %v625, %v629
  %v631 = vmul.f32 %v630, %v189
  %632 = vadd.xlane.f32.xlu0 %v631
  %v633 = vpop.xlane.xlu0 %632
  %vm634 = vcmp.gt.s32.totalorder %v183, 3
  %v635 = vsel %vm634, 1, 0
  %v636 = vcvt.s32.f32 %v635
  %v637 = vmul.f32 %v633, %v636
  %v638 = vadd.f32 %v637, %v196
  %vm639 = vcmp.eq.s32.totalorder %v199, 3
  %641 = vset.pattern.permute.xlu0 0
  %642 = vperm.xlu0 %641, %v638
  %v643 = vpop.permute.xlu0 %642
  %v645 = vsel %vm639, %v643, %v538
  %s646 = scalar_lea.vmem [#allocation2], 32
  %v647 = vld [vmem:[%s646] sm:$0xff]
  %648 = vmatprep.subr.mxu0 0.0
  %649 = vmatpush1.msra.mxu0 %v219
  %650 = vmatprep.subr.mxu0 0.0
  %651 = vmatpush1.msra.mxu0 %v218
  %652 = vmatprep.subr.mxu0 0.0
  %653 = vmatpush1.msra.mxu0 %v217
  %654 = vmatprep.subr.mxu0 0.0
  %655 = vmatpush1.msra.mxu0 %v216
  %656 = vmatprep.subr.mxu0 0.0
  %657 = vmatpush1.msra.mxu0 %v215
  %658 = vmatprep.subr.mxu0 0.0
  %659 = vmatpush1.msra.mxu0 %v214
  %660 = vmatprep.subr.mxu0 0.0
  %661 = vmatpush1.msra.mxu0 %v213
  %662 = vmatprep.subr.mxu0 0.0
  %663 = vmatpush1.msra.mxu0 %v212
  %664 = vmatprep.subr.mxu0 0.0
  %665 = vmatpush1.msra.mxu0 %v211
  %666 = vmatprep.subr.mxu0 0.0
  %667 = vmatpush1.msra.mxu0 %v210
  %668 = vmatprep.subr.mxu0 0.0
  %669 = vmatpush1.msra.mxu0 %v209
  %670 = vmatprep.subr.mxu0 0.0
  %671 = vmatpush1.msra.mxu0 %v208
  %672 = vmatprep.subr.mxu0 0.0
  %673 = vmatpush1.msra.mxu0 %v207
  %674 = vmatprep.subr.mxu0 0.0
  %675 = vmatpush1.msra.mxu0 %v206
  %676 = vmatprep.subr.mxu0 0.0
  %677 = vmatpush1.msra.mxu0 %v205
  %678 = vmatprep.subr.mxu0 0.0
  %679 = vmatpush1.msra.mxu0 %v204
  %680 = vmatprep.subr.mxu0 0.0
  %681 = vmatpush2.msra.mxu0 0.0
  %682 = vmatprep.subr.mxu0 0.0
  %683 = vmatpush2.msra.mxu0 0.0
  %684 = vmatprep.subr.mxu0 0.0
  %685 = vmatpush2.msra.mxu0 0.0
  %686 = vmatprep.subr.mxu0 0.0
  %687 = vmatpush2.msra.mxu0 0.0
  %688 = vmatprep.subr.mxu0 0.0
  %689 = vmatpush2.msra.mxu0 0.0
  %690 = vmatprep.subr.mxu0 0.0
  %691 = vmatpush2.msra.mxu0 0.0
  %692 = vmatprep.subr.mxu0 0.0
  %693 = vmatpush2.msra.mxu0 0.0
  %694 = vmatprep.subr.mxu0 0.0
  %695 = vmatpush2.msra.mxu0 0.0
  %696 = vmatprep.subr.mxu0 0.0
  %697 = vmatpush2.msra.mxu0 0.0
  %698 = vmatprep.subr.mxu0 0.0
  %699 = vmatpush2.msra.mxu0 0.0
  %700 = vmatprep.subr.mxu0 0.0
  %701 = vmatpush2.msra.mxu0 0.0
  %702 = vmatprep.subr.mxu0 0.0
  %703 = vmatpush2.msra.mxu0 0.0
  %704 = vmatprep.subr.mxu0 0.0
  %705 = vmatpush2.msra.mxu0 0.0
  %706 = vmatprep.subr.mxu0 0.0
  %707 = vmatpush2.msra.mxu0 0.0
  %708 = vmatprep.subr.mxu0 0.0
  %709 = vmatpush2.msra.mxu0 0.0
  %710 = vmatprep.subr.mxu0 0.0
  %711 = vmatpush2.msra.mxu0 0.0
  %712 = vmatprep.mubr.f32.mxu0 0.0
  %713 = vmatmul.mubr.f32.gmra.mxu0 %v630
  %v714 = vpop.f32.mrf.mxu0
  %v715 = vadd.f32 0.0, %v714
  %v716 = vpop.f32.mrf.mxu0
  %717 = vdwg.mxu0
  %v718 = vadd.f32 %v647, %v715
  %v719 = vtanh.pop %v718
  %v720 = vxor.u32 %v718, 2147483648
  %v721 = vmul.f32 %v720, 1.442695
  %v722 = vpow.pop %v721
  %v723 = vadd.f32 %v722, 1.0
  %v724 = vrcp.pop %v723
  %v725 = vmul.f32 1.0, %v724
  %v726 = vsel %vm202, %v719, %v725
  %727 = vrot.lane.b32.xlu0 %v726, 96
  %v728 = vpop.permute.xlu0 %727
  %729 = vrot.lane.b32.xlu0 %v726, 64
  %v730 = vpop.permute.xlu0 %729
  %731 = vrot.lane.b32.xlu0 %v726, 32
  %v732 = vpop.permute.xlu0 %731
  %v733 = vmul.f32 %v728, %v628
  %v734 = vmul.f32 %v726, %v730
  %v735 = vadd.f32 %v733, %v734
  %v736 = vtanh.pop %v735
  %v737 = vmul.f32 %v732, %v736
  %v738 = vmul.f32 %v737, %v189
  %739 = vadd.xlane.f32.xlu0 %v738
  %v740 = vpop.xlane.xlu0 %739
  %vm741 = vcmp.gt.s32.totalorder %v183, 4
  %v742 = vsel %vm741, 1, 0
  %v743 = vcvt.s32.f32 %v742
  %v744 = vmul.f32 %v740, %v743
  %v745 = vadd.f32 %v744, %v196
  %vm746 = vcmp.eq.s32.totalorder %v199, 4
  %748 = vset.pattern.permute.xlu0 0
  %749 = vperm.xlu0 %748, %v745
  %v750 = vpop.permute.xlu0 %749
  %v752 = vsel %vm746, %v750, %v645
  %s753 = scalar_lea.vmem [#allocation2], 40
  %v754 = vld [vmem:[%s753] sm:$0xff]
  %755 = vmatprep.subr.mxu0 0.0
  %756 = vmatpush1.msra.mxu0 %v219
  %757 = vmatprep.subr.mxu0 0.0
  %758 = vmatpush1.msra.mxu0 %v218
  %759 = vmatprep.subr.mxu0 0.0
  %760 = vmatpush1.msra.mxu0 %v217
  %761 = vmatprep.subr.mxu0 0.0
  %762 = vmatpush1.msra.mxu0 %v216
  %763 = vmatprep.subr.mxu0 0.0
  %764 = vmatpush1.msra.mxu0 %v215
  %765 = vmatprep.subr.mxu0 0.0
  %766 = vmatpush1.msra.mxu0 %v214
  %767 = vmatprep.subr.mxu0 0.0
  %768 = vmatpush1.msra.mxu0 %v213
  %769 = vmatprep.subr.mxu0 0.0
  %770 = vmatpush1.msra.mxu0 %v212
  %771 = vmatprep.subr.mxu0 0.0
  %772 = vmatpush1.msra.mxu0 %v211
  %773 = vmatprep.subr.mxu0 0.0
  %774 = vmatpush1.msra.mxu0 %v210
  %775 = vmatprep.subr.mxu0 0.0
  %776 = vmatpush1.msra.mxu0 %v209
  %777 = vmatprep.subr.mxu0 0.0
  %778 = vmatpush1.msra.mxu0 %v208
  %779 = vmatprep.subr.mxu0 0.0
  %780 = vmatpush1.msra.mxu0 %v207
  %781 = vmatprep.subr.mxu0 0.0
  %782 = vmatpush1.msra.mxu0 %v206
  %783 = vmatprep.subr.mxu0 0.0
  %784 = vmatpush1.msra.mxu0 %v205
  %785 = vmatprep.subr.mxu0 0.0
  %786 = vmatpush1.msra.mxu0 %v204
  %787 = vmatprep.subr.mxu0 0.0
  %788 = vmatpush2.msra.mxu0 0.0
  %789 = vmatprep.subr.mxu0 0.0
  %790 = vmatpush2.msra.mxu0 0.0
  %791 = vmatprep.subr.mxu0 0.0
  %792 = vmatpush2.msra.mxu0 0.0
  %793 = vmatprep.subr.mxu0 0.0
  %794 = vmatpush2.msra.mxu0 0.0
  %795 = vmatprep.subr.mxu0 0.0
  %796 = vmatpush2.msra.mxu0 0.0
  %797 = vmatprep.subr.mxu0 0.0
  %798 = vmatpush2.msra.mxu0 0.0
  %799 = vmatprep.subr.mxu0 0.0
  %800 = vmatpush2.msra.mxu0 0.0
  %801 = vmatprep.subr.mxu0 0.0
  %802 = vmatpush2.msra.mxu0 0.0
  %803 = vmatprep.subr.mxu0 0.0
  %804 = vmatpush2.msra.mxu0 0.0
  %805 = vmatprep.subr.mxu0 0.0
  %806 = vmatpush2.msra.mxu0 0.0
  %807 = vmatprep.subr.mxu0 0.0
  %808 = vmatpush2.msra.mxu0 0.0
  %809 = vmatprep.subr.mxu0 0.0
  %810 = vmatpush2.msra.mxu0 0.0
  %811 = vmatprep.subr.mxu0 0.0
  %812 = vmatpush2.msra.mxu0 0.0
  %813 = vmatprep.subr.mxu0 0.0
  %814 = vmatpush2.msra.mxu0 0.0
  %815 = vmatprep.subr.mxu0 0.0
  %816 = vmatpush2.msra.mxu0 0.0
  %817 = vmatprep.subr.mxu0 0.0
  %818 = vmatpush2.msra.mxu0 0.0
  %819 = vmatprep.mubr.f32.mxu0 0.0
  %820 = vmatmul.mubr.f32.gmra.mxu0 %v737
  %v821 = vpop.f32.mrf.mxu0
  %v822 = vadd.f32 0.0, %v821
  %v823 = vpop.f32.mrf.mxu0
  %824 = vdwg.mxu0
  %v825 = vadd.f32 %v754, %v822
  %v826 = vtanh.pop %v825
  %v827 = vxor.u32 %v825, 2147483648
  %v828 = vmul.f32 %v827, 1.442695
  %v829 = vpow.pop %v828
  %v830 = vadd.f32 %v829, 1.0
  %v831 = vrcp.pop %v830
  %v832 = vmul.f32 1.0, %v831
  %v833 = vsel %vm202, %v826, %v832
  %834 = vrot.lane.b32.xlu0 %v833, 96
  %v835 = vpop.permute.xlu0 %834
  %836 = vrot.lane.b32.xlu0 %v833, 64
  %v837 = vpop.permute.xlu0 %836
  %838 = vrot.lane.b32.xlu0 %v833, 32
  %v839 = vpop.permute.xlu0 %838
  %v840 = vmul.f32 %v835, %v735
  %v841 = vmul.f32 %v833, %v837
  %v842 = vadd.f32 %v840, %v841
  %v843 = vtanh.pop %v842
  %v844 = vmul.f32 %v839, %v843
  %v845 = vmul.f32 %v844, %v189
  %846 = vadd.xlane.f32.xlu0 %v845
  %v847 = vpop.xlane.xlu0 %846
  %vm848 = vcmp.gt.s32.totalorder %v183, 5
  %v849 = vsel %vm848, 1, 0
  %v850 = vcvt.s32.f32 %v849
  %v851 = vmul.f32 %v847, %v850
  %v852 = vadd.f32 %v851, %v196
  %vm853 = vcmp.eq.s32.totalorder %v199, 5
  %855 = vset.pattern.permute.xlu0 0
  %856 = vperm.xlu0 %855, %v852
  %v857 = vpop.permute.xlu0 %856
  %v859 = vsel %vm853, %v857, %v752
  %s860 = scalar_lea.vmem [#allocation2], 48
  %v861 = vld [vmem:[%s860] sm:$0xff]
  %862 = vmatprep.subr.mxu0 0.0
  %863 = vmatpush1.msra.mxu0 %v219
  %864 = vmatprep.subr.mxu0 0.0
  %865 = vmatpush1.msra.mxu0 %v218
  %866 = vmatprep.subr.mxu0 0.0
  %867 = vmatpush1.msra.mxu0 %v217
  %868 = vmatprep.subr.mxu0 0.0
  %869 = vmatpush1.msra.mxu0 %v216
  %870 = vmatprep.subr.mxu0 0.0
  %871 = vmatpush1.msra.mxu0 %v215
  %872 = vmatprep.subr.mxu0 0.0
  %873 = vmatpush1.msra.mxu0 %v214
  %874 = vmatprep.subr.mxu0 0.0
  %875 = vmatpush1.msra.mxu0 %v213
  %876 = vmatprep.subr.mxu0 0.0
  %877 = vmatpush1.msra.mxu0 %v212
  %878 = vmatprep.subr.mxu0 0.0
  %879 = vmatpush1.msra.mxu0 %v211
  %880 = vmatprep.subr.mxu0 0.0
  %881 = vmatpush1.msra.mxu0 %v210
  %882 = vmatprep.subr.mxu0 0.0
  %883 = vmatpush1.msra.mxu0 %v209
  %884 = vmatprep.subr.mxu0 0.0
  %885 = vmatpush1.msra.mxu0 %v208
  %886 = vmatprep.subr.mxu0 0.0
  %887 = vmatpush1.msra.mxu0 %v207
  %888 = vmatprep.subr.mxu0 0.0
  %889 = vmatpush1.msra.mxu0 %v206
  %890 = vmatprep.subr.mxu0 0.0
  %891 = vmatpush1.msra.mxu0 %v205
  %892 = vmatprep.subr.mxu0 0.0
  %893 = vmatpush1.msra.mxu0 %v204
  %894 = vmatprep.subr.mxu0 0.0
  %895 = vmatpush2.msra.mxu0 0.0
  %896 = vmatprep.subr.mxu0 0.0
  %897 = vmatpush2.msra.mxu0 0.0
  %898 = vmatprep.subr.mxu0 0.0
  %899 = vmatpush2.msra.mxu0 0.0
  %900 = vmatprep.subr.mxu0 0.0
  %901 = vmatpush2.msra.mxu0 0.0
  %902 = vmatprep.subr.mxu0 0.0
  %903 = vmatpush2.msra.mxu0 0.0
  %904 = vmatprep.subr.mxu0 0.0
  %905 = vmatpush2.msra.mxu0 0.0
  %906 = vmatprep.subr.mxu0 0.0
  %907 = vmatpush2.msra.mxu0 0.0
  %908 = vmatprep.subr.mxu0 0.0
  %909 = vmatpush2.msra.mxu0 0.0
  %910 = vmatprep.subr.mxu0 0.0
  %911 = vmatpush2.msra.mxu0 0.0
  %912 = vmatprep.subr.mxu0 0.0
  %913 = vmatpush2.msra.mxu0 0.0
  %914 = vmatprep.subr.mxu0 0.0
  %915 = vmatpush2.msra.mxu0 0.0
  %916 = vmatprep.subr.mxu0 0.0
  %917 = vmatpush2.msra.mxu0 0.0
  %918 = vmatprep.subr.mxu0 0.0
  %919 = vmatpush2.msra.mxu0 0.0
  %920 = vmatprep.subr.mxu0 0.0
  %921 = vmatpush2.msra.mxu0 0.0
  %922 = vmatprep.subr.mxu0 0.0
  %923 = vmatpush2.msra.mxu0 0.0
  %924 = vmatprep.subr.mxu0 0.0
  %925 = vmatpush2.msra.mxu0 0.0
  %926 = vmatprep.mubr.f32.mxu0 0.0
  %927 = vmatmul.mubr.f32.gmra.mxu0 %v844
  %v928 = vpop.f32.mrf.mxu0
  %v929 = vadd.f32 0.0, %v928
  %v930 = vpop.f32.mrf.mxu0
  %931 = vdwg.mxu0
  %v932 = vadd.f32 %v861, %v929
  %v933 = vtanh.pop %v932
  %v934 = vxor.u32 %v932, 2147483648
  %v935 = vmul.f32 %v934, 1.442695
  %v936 = vpow.pop %v935
  %v937 = vadd.f32 %v936, 1.0
  %v938 = vrcp.pop %v937
  %v939 = vmul.f32 1.0, %v938
  %v940 = vsel %vm202, %v933, %v939
  %941 = vrot.lane.b32.xlu0 %v940, 96
  %v942 = vpop.permute.xlu0 %941
  %943 = vrot.lane.b32.xlu0 %v940, 64
  %v944 = vpop.permute.xlu0 %943
  %945 = vrot.lane.b32.xlu0 %v940, 32
  %v946 = vpop.permute.xlu0 %945
  %v947 = vmul.f32 %v942, %v842
  %v948 = vmul.f32 %v940, %v944
  %v949 = vadd.f32 %v947, %v948
  %v950 = vtanh.pop %v949
  %v951 = vmul.f32 %v946, %v950
  %v952 = vmul.f32 %v951, %v189
  %953 = vadd.xlane.f32.xlu0 %v952
  %v954 = vpop.xlane.xlu0 %953
  %vm955 = vcmp.gt.s32.totalorder %v183, 6
  %v956 = vsel %vm955, 1, 0
  %v957 = vcvt.s32.f32 %v956
  %v958 = vmul.f32 %v954, %v957
  %v959 = vadd.f32 %v958, %v196
  %vm960 = vcmp.eq.s32.totalorder %v199, 6
  %962 = vset.pattern.permute.xlu0 0
  %963 = vperm.xlu0 %962, %v959
  %v964 = vpop.permute.xlu0 %963
  %v966 = vsel %vm960, %v964, %v859
  %s967 = scalar_lea.vmem [#allocation2], 56
  %v968 = vld [vmem:[%s967] sm:$0xff]
  %969 = vmatprep.subr.mxu0 0.0
  %970 = vmatpush1.msra.mxu0 %v219
  %971 = vmatprep.subr.mxu0 0.0
  %972 = vmatpush1.msra.mxu0 %v218
  %973 = vmatprep.subr.mxu0 0.0
  %974 = vmatpush1.msra.mxu0 %v217
  %975 = vmatprep.subr.mxu0 0.0
  %976 = vmatpush1.msra.mxu0 %v216
  %977 = vmatprep.subr.mxu0 0.0
  %978 = vmatpush1.msra.mxu0 %v215
  %979 = vmatprep.subr.mxu0 0.0
  %980 = vmatpush1.msra.mxu0 %v214
  %981 = vmatprep.subr.mxu0 0.0
  %982 = vmatpush1.msra.mxu0 %v213
  %983 = vmatprep.subr.mxu0 0.0
  %984 = vmatpush1.msra.mxu0 %v212
  %985 = vmatprep.subr.mxu0 0.0
  %986 = vmatpush1.msra.mxu0 %v211
  %987 = vmatprep.subr.mxu0 0.0
  %988 = vmatpush1.msra.mxu0 %v210
  %989 = vmatprep.subr.mxu0 0.0
  %990 = vmatpush1.msra.mxu0 %v209
  %991 = vmatprep.subr.mxu0 0.0
  %992 = vmatpush1.msra.mxu0 %v208
  %993 = vmatprep.subr.mxu0 0.0
  %994 = vmatpush1.msra.mxu0 %v207
  %995 = vmatprep.subr.mxu0 0.0
  %996 = vmatpush1.msra.mxu0 %v206
  %997 = vmatprep.subr.mxu0 0.0
  %998 = vmatpush1.msra.mxu0 %v205
  %999 = vmatprep.subr.mxu0 0.0
  %1000 = vmatpush1.msra.mxu0 %v204
  %1001 = vmatprep.subr.mxu0 0.0
  %1002 = vmatpush2.msra.mxu0 0.0
  %1003 = vmatprep.subr.mxu0 0.0
  %1004 = vmatpush2.msra.mxu0 0.0
  %1005 = vmatprep.subr.mxu0 0.0
  %1006 = vmatpush2.msra.mxu0 0.0
  %1007 = vmatprep.subr.mxu0 0.0
  %1008 = vmatpush2.msra.mxu0 0.0
  %1009 = vmatprep.subr.mxu0 0.0
  %1010 = vmatpush2.msra.mxu0 0.0
  %1011 = vmatprep.subr.mxu0 0.0
  %1012 = vmatpush2.msra.mxu0 0.0
  %1013 = vmatprep.subr.mxu0 0.0
  %1014 = vmatpush2.msra.mxu0 0.0
  %1015 = vmatprep.subr.mxu0 0.0
  %1016 = vmatpush2.msra.mxu0 0.0
  %1017 = vmatprep.subr.mxu0 0.0
  %1018 = vmatpush2.msra.mxu0 0.0
  %1019 = vmatprep.subr.mxu0 0.0
  %1020 = vmatpush2.msra.mxu0 0.0
  %1021 = vmatprep.subr.mxu0 0.0
  %1022 = vmatpush2.msra.mxu0 0.0
  %1023 = vmatprep.subr.mxu0 0.0
  %1024 = vmatpush2.msra.mxu0 0.0
  %1025 = vmatprep.subr.mxu0 0.0
  %1026 = vmatpush2.msra.mxu0 0.0
  %1027 = vmatprep.subr.mxu0 0.0
  %1028 = vmatpush2.msra.mxu0 0.0
  %1029 = vmatprep.subr.mxu0 0.0
  %1030 = vmatpush2.msra.mxu0 0.0
  %1031 = vmatprep.subr.mxu0 0.0
  %1032 = vmatpush2.msra.mxu0 0.0
  %1033 = vmatprep.mubr.f32.mxu0 0.0
  %1034 = vmatmul.mubr.f32.gmra.mxu0 %v951
  %v1035 = vpop.f32.mrf.mxu0
  %v1036 = vadd.f32 0.0, %v1035
  %v1037 = vpop.f32.mrf.mxu0
  %1038 = vdwg.mxu0
  %v1039 = vadd.f32 %v968, %v1036
  %v1040 = vtanh.pop %v1039
  %v1041 = vxor.u32 %v1039, 2147483648
  %v1042 = vmul.f32 %v1041, 1.442695
  %v1043 = vpow.pop %v1042
  %v1044 = vadd.f32 %v1043, 1.0
  %v1045 = vrcp.pop %v1044
  %v1046 = vmul.f32 1.0, %v1045
  %v1047 = vsel %vm202, %v1040, %v1046
  %1048 = vrot.lane.b32.xlu0 %v1047, 96
  %v1049 = vpop.permute.xlu0 %1048
  %1050 = vrot.lane.b32.xlu0 %v1047, 64
  %v1051 = vpop.permute.xlu0 %1050
  %1052 = vrot.lane.b32.xlu0 %v1047, 32
  %v1053 = vpop.permute.xlu0 %1052
  %v1054 = vmul.f32 %v1049, %v949
  %v1055 = vmul.f32 %v1047, %v1051
  %v1056 = vadd.f32 %v1054, %v1055
  %v1057 = vtanh.pop %v1056
  %v1058 = vmul.f32 %v1053, %v1057
  %v1059 = vmul.f32 %v1058, %v189
  %1060 = vadd.xlane.f32.xlu0 %v1059
  %v1061 = vpop.xlane.xlu0 %1060
  %vm1062 = vcmp.gt.s32.totalorder %v183, 7
  %v1063 = vsel %vm1062, 1, 0
  %v1064 = vcvt.s32.f32 %v1063
  %v1065 = vmul.f32 %v1061, %v1064
  %v1066 = vadd.f32 %v1065, %v196
  %vm1067 = vcmp.eq.s32.totalorder %v199, 7
  %1069 = vset.pattern.permute.xlu0 0
  %1070 = vperm.xlu0 %1069, %v1066
  %v1071 = vpop.permute.xlu0 %1070
  %v1073 = vsel %vm1067, %v1071, %v966
  %1074 = vst [vmem:[%s7] sm:$0xff] %v1073
  // Predicated region
  $region30: #{vad_forward.1} parent=0 // pred_check
    _
  $region31: #{vad_forward.1} parent=0 // pred_check_branch
    %1076 = sbr.rel (0) target = $region33
  $region32: #{vad_forward.1} parent=0 // pred_region
    _
  $region33: #{vad_forward.1} parent=0 // pred_fallthru
    _
  // Predicated region
  $region34: #{vad_forward.1} parent=0 // pred_check
    _
  $region35: #{vad_forward.1} parent=0 // pred_check_branch
    %1078 = sbr.rel (0) target = $region37
  $region36: #{vad_forward.1} parent=0 // pred_region
    _
  $region37: #{vad_forward.1} parent=0 // pred_fallthru
    _

</llo_original>
